<compile_context>
chip_gen: v7x
topology: tpu7x:2x2x1
jax: 0.10.0
libtpu: 0.0.40
codegen_flags: <defaults>
</compile_context>

<pallas_src>
import functools

import jax
import jax.numpy as jnp
from jax.experimental import pallas as pl
from jax.experimental.pallas import tpu as pltpu

_LANE = 128


def _round_up(v, m):
    return (v + m - 1) // m * m


def _ln_rows_kernel(x_ref, g_ref, b_ref, o_ref, *, eps):
    """Per-row LayerNorm; block is (tr, D) with the full feature dim last."""
    x = x_ref[...].astype(jnp.float32)
    mean = jnp.mean(x, axis=-1, keepdims=True)
    c = x - mean
    var = jnp.mean(c * c, axis=-1, keepdims=True)          # biased, like torch
    inv = jax.lax.rsqrt(var + eps)
    o_ref[...] = (c * inv * g_ref[...] + b_ref[...]).astype(o_ref.dtype)


def _ln_packed_kernel(x_ref, g_ref, b_ref, s_ref, st_ref, o_ref, *, eps):
    """LayerNorm with k rows folded into the lane axis (L = k*D = 128).

    One-pass stats: sum(x) and sum(x*x) via two independent MXU dots against a
    segment matrix with 1/D pre-folded in, then two independent broadcast-back
    dots.  All loads/stores stay lane-dense (full 128-lane vst, no vst.msk).
    Dots use precision=HIGHEST so mean/var keep near-f32 accuracy.
    """
    hi = jax.lax.Precision.HIGHEST
    x = x_ref[...].astype(jnp.float32)                                       # (tr, L)
    s = s_ref[...]                                                           # (L, k), entries 1/D
    st = st_ref[...]                                                         # (k, L), 0/1
    mean = jnp.dot(x, s, precision=hi, preferred_element_type=jnp.float32)   # (tr, k)
    ex2 = jnp.dot(x * x, s, precision=hi, preferred_element_type=jnp.float32)
    var = jnp.maximum(ex2 - mean * mean, 0.0)            # clamp tiny cancellation negatives
    inv = jax.lax.rsqrt(var + eps)
    a = jnp.dot(inv, st, precision=hi, preferred_element_type=jnp.float32)          # (tr, L)
    b = jnp.dot(mean * inv, st, precision=hi, preferred_element_type=jnp.float32)   # (tr, L)
    # (x - mean) * inv == x*a - b  ->  affine with pre-tiled gamma/beta.
    o_ref[...] = ((x * a - b) * g_ref[...] + b_ref[...]).astype(o_ref.dtype)


def _budgets():
    """(tile_budget_bytes, vmem_limit_bytes), generation-aware."""
    vmem_cap = 64 << 20
    try:
        vmem_cap = int(getattr(pltpu.get_tpu_info(), "vmem_capacity_bytes", vmem_cap))
    except Exception:
        pass
    if vmem_cap >= (96 << 20):          # v5e / v6e: 128 MiB VMEM parts
        return 24 << 20, 64 << 20
    return 12 << 20, 32 << 20           # v7x (64 MiB physical) / unknown: stay conservative


def layernorm_pallas(x, gamma, beta, *, eps=1e-5):
    """LayerNorm over the last dim of x (any leading dims), via Pallas."""
    orig_shape = x.shape
    D = orig_shape[-1]
    x2 = x.reshape(-1, D)               # contiguous reshape: layout no-op
    R = x2.shape[0]

    # Hoist affine params to f32 once on the wrapper side.
    g32 = gamma.reshape(1, D).astype(jnp.float32)
    b32 = beta.reshape(1, D).astype(jnp.float32)

    # Lane packing: fold k rows into the lane axis when D divides 128.
    packed = (D < _LANE) and (_LANE % D == 0) and (R % (_LANE // D) == 0)
    # TODO(synk): when R % k != 0, handle the <k tail rows in-kernel instead of
    # falling back to the lane-sparse rows path.
    if packed:
        k = _LANE // D
        L = _LANE
        xw = x2.reshape(R // k, L)      # contiguous reshape: layout no-op
        gw = jnp.tile(g32, (1, k))
        bw = jnp.tile(b32, (1, k))
        grp = jnp.arange(L) // D
        s = (grp[:, None] == jnp.arange(k)[None, :]).astype(jnp.float32) * (1.0 / D)  # (L, k)
        st = (grp[None, :] == jnp.arange(k)[:, None]).astype(jnp.float32)             # (k, L)
    else:
        k, L = 1, D
        xw, gw, bw = x2, g32, b32

    Rw = xw.shape[0]
    itemsize = x.dtype.itemsize
    row_align = max(8, 32 // itemsize)  # 8 for f32, 16 for bf16 (sublane packing)

    tile_budget, vmem_limit = _budgets()
    # Per-row footprint: double-buffered in + out tiles, plus ~3 f32 full-tile
    # temporaries materialized inside the kernel (x_f32, x*x / centered copy, out).
    bytes_per_row = (2 * 2 * itemsize + 3 * 4) * L
    tr_cap = max(row_align, (tile_budget // bytes_per_row) // row_align * row_align)

    if Rw <= row_align:
        tr = Rw                          # single, full-extent block (always legal)
    else:
        # >= 2 grid steps so both v7x TensorCores get work (and DMA/compute overlap).
        tr = min(tr_cap, _round_up(pl.cdiv(Rw, 2), row_align))
    grid_n = pl.cdiv(Rw, tr)             # last block may be partial; Pallas masks it

    compiler_params = pltpu.CompilerParams(
        # TODO(synk): verify "parallel" shards grid steps across both v7x TCs;
        # otherwise switch to pltpu.CORE_PARALLEL with an explicit core axis.
        dimension_semantics=("parallel",),
        vmem_limit_bytes=vmem_limit,
    )

    if packed:
        kernel = functools.partial(_ln_packed_kernel, eps=eps)
        in_specs = [
            pl.BlockSpec((tr, L), lambda i: (i, 0)),
            pl.BlockSpec((1, L), lambda i: (0, 0)),
            pl.BlockSpec((1, L), lambda i: (0, 0)),
            pl.BlockSpec((L, k), lambda i: (0, 0)),
            pl.BlockSpec((k, L), lambda i: (0, 0)),
        ]
        operands = (xw, gw, bw, s, st)
    else:
        kernel = functools.partial(_ln_rows_kernel, eps=eps)
        in_specs = [
            pl.BlockSpec((tr, L), lambda i: (i, 0)),
            pl.BlockSpec((1, L), lambda i: (0, 0)),
            pl.BlockSpec((1, L), lambda i: (0, 0)),
        ]
        operands = (xw, gw, bw)

    out = pl.pallas_call(
        kernel,
        out_shape=jax.ShapeDtypeStruct((Rw, L), x.dtype),
        grid_spec=pltpu.PrefetchScalarGridSpec(
            num_scalar_prefetch=0,
            grid=(grid_n,),
            in_specs=in_specs,
            out_specs=pl.BlockSpec((tr, L), lambda i: (i, 0)),
        ),
        compiler_params=compiler_params,
    )(*operands)

    if packed:
        out = out.reshape(R, D)          # contiguous reshape: layout no-op
    return out.reshape(orig_shape)


class PreNormPallas:
    """JAX/Pallas port of PreNorm(dim, fn): y = fn(LayerNorm(x), args[0], args[1])."""

    def __init__(self, dim, fn, dtype=jnp.float32):
        # nn.LayerNorm(dim) default init: weight = 1, bias = 0, eps = 1e-5.
        self.gamma = jnp.ones((dim,), dtype=dtype)
        self.beta = jnp.zeros((dim,), dtype=dtype)
        self.eps = 1e-5
        self.fn = fn

    def __call__(self, x, *args):
        # TODO(synk): when fn is a concrete Pallas kernel (masked Attention / FFN),
        # emit this LayerNorm as a prologue of that kernel's first pipeline stage
        # to remove one full HBM round trip of the activations; with fn an
        # arbitrary callable it stays a standalone memory-bound streaming pass.
        normed = layernorm_pallas(x, self.gamma, self.beta, eps=self.eps)
        return self.fn(normed, args[0], args[1])


def _ln_reference(x, gamma, beta, eps=1e-5):
    mean = jnp.mean(x, axis=-1, keepdims=True)
    var = jnp.mean((x - mean) ** 2, axis=-1, keepdims=True)
    return (x - mean) / jnp.sqrt(var + eps) * gamma + beta


if __name__ == "__main__":
    key = jax.random.PRNGKey(0)
    kx, k0, k1, k2, k3, k4 = jax.random.split(key, 6)

    # fn stands in for the wrapped sub-module (Attention/FFN); a simple callable
    # that consumes the forwarded args so the call signature matches.
    def fn(normed, a0, a1):
        return normed

    # Case 1: narrow D (lane-packed, one-pass MXU stats path).
    B, N, D = 2, 8, 32
    x = jax.random.normal(kx, (B, N, D), dtype=jnp.float32)
    arg0 = jax.random.normal(k0, (B, N, D), dtype=jnp.float32)
    arg1 = jax.random.normal(k1, (B, N, D), dtype=jnp.float32)
    module = PreNormPallas(D, fn)
    out = module(x, arg0, arg1)
    jax.block_until_ready(out)
    ref = fn(_ln_reference(x, module.gamma, module.beta), arg0, arg1)
    assert out.shape == (B, N, D)
    assert jnp.max(jnp.abs(out - ref)) < 5e-5

    # Case 2: wide D (rows path, lane-dense) with a row count that forces >=2
    # grid steps and an exact split.
    D2 = 128
    x2 = jax.random.normal(k2, (B, N, D2), dtype=jnp.float32)
    module2 = PreNormPallas(D2, fn)
    out2 = module2(x2, arg0, arg1)
    jax.block_until_ready(out2)
    ref2 = fn(_ln_reference(x2, module2.gamma, module2.beta), arg0, arg1)
    assert jnp.max(jnp.abs(out2 - ref2)) < 5e-5

    # Case 3: row count not divisible by the tile -> partial last block
    # (exercises Pallas boundary masking, no host pad / slice).
    N3 = 9
    x3 = jax.random.normal(k3, (B, N3, D2), dtype=jnp.float32)
    out3 = layernorm_pallas(x3, module2.gamma, module2.beta, eps=1e-5)
    jax.block_until_ready(out3)
    ref3 = _ln_reference(x3, module2.gamma, module2.beta)
    assert jnp.max(jnp.abs(out3 - ref3)) < 5e-5

    # Case 4: narrow D but R % k != 0 -> rows-path fallback with partial block.
    x4 = jax.random.normal(k4, (1, 9, D), dtype=jnp.float32)
    out4 = layernorm_pallas(x4, module.gamma, module.beta, eps=1e-5)
    jax.block_until_ready(out4)
    ref4 = _ln_reference(x4, module.gamma, module.beta)
    assert jnp.max(jnp.abs(out4 - ref4)) < 5e-5

    print("KERNEL_OK")
</pallas_src>

<mosaic_0001>
module attributes {stable_mosaic.version = 11 : i64} {
  func.func @_ln_packed_kernel(%arg0: i32, %arg1: memref<4x128xf32, #tpu.memory_space<vmem>>, %arg2: memref<1x128xf32, #tpu.memory_space<vmem>>, %arg3: memref<1x128xf32, #tpu.memory_space<vmem>>, %arg4: memref<128x4xf32, #tpu.memory_space<vmem>>, %arg5: memref<4x128xf32, #tpu.memory_space<vmem>>, %arg6: memref<4x128xf32, #tpu.memory_space<vmem>>) attributes {dimension_semantics = [#tpu.dimension_semantics<parallel>], iteration_bounds = array<i64: 1>, scalar_prefetch = 0 : i64, scratch_operands = 0 : i64, tpu.core_type = #tpu.core_type<tc>, window_params = [{transform_indices = @transform_0, window_bounds = array<i64: 4, 128>}, {pipeline_mode = #tpu.pipeline_mode<synchronous>, transform_indices = @transform_1, window_bounds = array<i64: 1, 128>}, {pipeline_mode = #tpu.pipeline_mode<synchronous>, transform_indices = @transform_2, window_bounds = array<i64: 1, 128>}, {pipeline_mode = #tpu.pipeline_mode<synchronous>, transform_indices = @transform_3, window_bounds = array<i64: 128, 4>}, {pipeline_mode = #tpu.pipeline_mode<synchronous>, transform_indices = @transform_4, window_bounds = array<i64: 4, 128>}, {transform_indices = @transform_5, window_bounds = array<i64: 4, 128>}]} {
    %c0 = arith.constant 0 : index
    %c0_0 = arith.constant 0 : index
    %0 = vector.load %arg1[%c0, %c0_0] : memref<4x128xf32, #tpu.memory_space<vmem>>, vector<4x128xf32>
    %c0_1 = arith.constant 0 : index
    %c0_2 = arith.constant 0 : index
    %1 = vector.load %arg4[%c0_1, %c0_2] : memref<128x4xf32, #tpu.memory_space<vmem>>, vector<128x4xf32>
    %c0_3 = arith.constant 0 : index
    %c0_4 = arith.constant 0 : index
    %2 = vector.load %arg5[%c0_3, %c0_4] : memref<4x128xf32, #tpu.memory_space<vmem>>, vector<4x128xf32>
    %cst = arith.constant dense<0.000000e+00> : vector<4x4xf32>
    %3 = tpu.matmul %0, %1, %cst {dimension_numbers = #tpu.dot_dimension_numbers<[1], [0], [0], [1], [0, 0, 1, 1], [], []>, precision = #tpu.contract_precision<fp32>} : vector<4x128xf32>, vector<128x4xf32>, vector<4x4xf32> -> vector<4x4xf32>
    %4 = arith.mulf %0, %0 : vector<4x128xf32>
    %cst_5 = arith.constant dense<0.000000e+00> : vector<4x4xf32>
    %5 = tpu.matmul %4, %1, %cst_5 {dimension_numbers = #tpu.dot_dimension_numbers<[1], [0], [0], [1], [0, 0, 1, 1], [], []>, precision = #tpu.contract_precision<fp32>} : vector<4x128xf32>, vector<128x4xf32>, vector<4x4xf32> -> vector<4x4xf32>
    %6 = arith.mulf %3, %3 : vector<4x4xf32>
    %7 = arith.subf %5, %6 : vector<4x4xf32>
    %cst_6 = arith.constant 0.000000e+00 : f32
    %8 = vector.broadcast %cst_6 : f32 to vector<4x4xf32>
    %9 = arith.maximumf %7, %8 : vector<4x4xf32>
    %cst_7 = arith.constant 9.99999974E-6 : f32
    %10 = vector.broadcast %cst_7 : f32 to vector<4x4xf32>
    %11 = arith.addf %9, %10 : vector<4x4xf32>
    %12 = math.rsqrt %11 : vector<4x4xf32>
    %cst_8 = arith.constant dense<0.000000e+00> : vector<4x128xf32>
    %13 = tpu.matmul %12, %2, %cst_8 {dimension_numbers = #tpu.dot_dimension_numbers<[1], [0], [0], [1], [0, 0, 1, 1], [], []>, precision = #tpu.contract_precision<fp32>} : vector<4x4xf32>, vector<4x128xf32>, vector<4x128xf32> -> vector<4x128xf32>
    %14 = arith.mulf %3, %12 : vector<4x4xf32>
    %cst_9 = arith.constant dense<0.000000e+00> : vector<4x128xf32>
    %15 = tpu.matmul %14, %2, %cst_9 {dimension_numbers = #tpu.dot_dimension_numbers<[1], [0], [0], [1], [0, 0, 1, 1], [], []>, precision = #tpu.contract_precision<fp32>} : vector<4x4xf32>, vector<4x128xf32>, vector<4x128xf32> -> vector<4x128xf32>
    %16 = arith.mulf %0, %13 : vector<4x128xf32>
    %17 = arith.subf %16, %15 : vector<4x128xf32>
    %c0_10 = arith.constant 0 : index
    %c0_11 = arith.constant 0 : index
    %18 = vector.load %arg2[%c0_10, %c0_11] : memref<1x128xf32, #tpu.memory_space<vmem>>, vector<1x128xf32>
    %19 = vector.broadcast %18 : vector<1x128xf32> to vector<4x128xf32>
    %20 = arith.mulf %17, %19 : vector<4x128xf32>
    %c0_12 = arith.constant 0 : index
    %c0_13 = arith.constant 0 : index
    %21 = vector.load %arg3[%c0_12, %c0_13] : memref<1x128xf32, #tpu.memory_space<vmem>>, vector<1x128xf32>
    %22 = vector.broadcast %21 : vector<1x128xf32> to vector<4x128xf32>
    %23 = arith.addf %20, %22 : vector<4x128xf32>
    %c0_14 = arith.constant 0 : index
    %c0_15 = arith.constant 0 : index
    %24 = vector.load %arg6[%c0_14, %c0_15] : memref<4x128xf32, #tpu.memory_space<vmem>>, vector<4x128xf32>
    tpu.vector_store %arg6[%c0_14, %c0_15], %23 {strides = array<i32>} : memref<4x128xf32, #tpu.memory_space<vmem>>, vector<4x128xf32>,
    return
  }
  func.func @transform_0(%arg0: i32) -> (i32, i32) {
    %c0_i32 = arith.constant 0 : i32
    %c0_i32_0 = arith.constant 0 : i32
    return %arg0, %c0_i32 : i32, i32
  }
  func.func @transform_1(%arg0: i32) -> (i32, i32) {
    %c0_i32 = arith.constant 0 : i32
    %c0_i32_0 = arith.constant 0 : i32
    %c0_i32_1 = arith.constant 0 : i32
    return %c0_i32, %c0_i32_0 : i32, i32
  }
  func.func @transform_2(%arg0: i32) -> (i32, i32) {
    %c0_i32 = arith.constant 0 : i32
    %c0_i32_0 = arith.constant 0 : i32
    %c0_i32_1 = arith.constant 0 : i32
    return %c0_i32, %c0_i32_0 : i32, i32
  }
  func.func @transform_3(%arg0: i32) -> (i32, i32) {
    %c0_i32 = arith.constant 0 : i32
    %c0_i32_0 = arith.constant 0 : i32
    %c0_i32_1 = arith.constant 0 : i32
    return %c0_i32, %c0_i32_0 : i32, i32
  }
  func.func @transform_4(%arg0: i32) -> (i32, i32) {
    %c0_i32 = arith.constant 0 : i32
    %c0_i32_0 = arith.constant 0 : i32
    %c0_i32_1 = arith.constant 0 : i32
    return %c0_i32, %c0_i32_0 : i32, i32
  }
  func.func @transform_5(%arg0: i32) -> (i32, i32) {
    %c0_i32 = arith.constant 0 : i32
    %c0_i32_0 = arith.constant 0 : i32
    return %arg0, %c0_i32 : i32, i32
  }
}

</mosaic_0001>

<llo_original>
// kernel: tpu_custom_call.1
$region0: #{tpu_custom_call.1}
  #allocation0 [shape = 'u32[]', space=smem, size = 0x4, offset = 0x4, fixed_abs, tag = 'smem constant byte address 0x4 - core index']
  #allocation1 [shape = 'u32[144,128]{1,0:T(1,128)}', space=vmem, size = 0x12000, scoped, tag = 'internal scratch']
  %s0 = inlined_call_operand.vmem [shape: f32[4,128], index: 0, kind: input, shape index: {}]
  %s1 = inlined_call_operand.vmem [shape: f32[1,128], index: 1, kind: input, shape index: {}]
  %s2 = inlined_call_operand.vmem [shape: f32[1,128], index: 2, kind: input, shape index: {}]
  %s3 = inlined_call_operand.vmem [shape: f32[128,4], index: 3, kind: input, shape index: {}]
  %s4 = inlined_call_operand.vmem [shape: f32[4,128], index: 4, kind: input, shape index: {}]
  %s5 = inlined_call_operand.hbm [shape: f32[4,128], index: 5, kind: output, shape index: {}]
  %s6 = sld [smem:[#allocation0]]
  $region30: #{tpu_custom_call.1} parent=0
    _
  %s8 = ssub.s32 1, %s6
  %s9 = scalar_select 0, %s8, %s6
  $region1: #{tpu_custom_call.1} parent=0
    #allocation2 [shape = 'u8[2048]{0}', space=vmem, size = 0x800, scoped, tag = 'output window, operand 0, single buffered']
    #allocation3 [shape = 's32[1]{0}', space=sflag, size = 0x4, scoped, tag = 'scoped memory for tpu_custom_call.1']
    %10 = vsyncpa [#allocation3], 0
    // Predicated region
    $region2: #{tpu_custom_call.1} parent=1 // pred_check
      _
    $region3: #{tpu_custom_call.1} parent=1 // pred_check_branch
      %12 = sbr.rel (0) target = $region5
    $region4: #{tpu_custom_call.1} parent=1 // pred_region
      _
    $region5: #{tpu_custom_call.1} parent=1 // pred_fallthru
      _
    // Predicated region
    $region6: #{tpu_custom_call.1} parent=1 // pred_check
      _
    $region7: #{tpu_custom_call.1} parent=1 // pred_check_branch
      %14 = sbr.rel (0) target = $region9
    $region8: #{tpu_custom_call.1} parent=1 // pred_region
      _
    $region9: #{tpu_custom_call.1} parent=1 // pred_fallthru
      _
    // Predicated region
    $region10: #{tpu_custom_call.1} parent=1 // pred_check
      _
    $region11: #{tpu_custom_call.1} parent=1 // pred_check_branch
      %16 = sbr.rel (0) target = $region13
    $region12: #{tpu_custom_call.1} parent=1 // pred_region
      _
    $region13: #{tpu_custom_call.1} parent=1 // pred_fallthru
      _
    // Predicated region
    $region14: #{tpu_custom_call.1} parent=1 // pred_check
      _
    $region15: #{tpu_custom_call.1} parent=1 // pred_check_branch
      %18 = sbr.rel (0) target = $region17
    $region16: #{tpu_custom_call.1} parent=1 // pred_region
      _
    $region17: #{tpu_custom_call.1} parent=1 // pred_fallthru
      _
    // Predicated region
    $region18: #{tpu_custom_call.1} parent=1 // pred_check
      _
    $region19: #{tpu_custom_call.1} parent=1 // pred_check_branch
      %20 = sbr.rel (0) target = $region21
    $region20: #{tpu_custom_call.1} parent=1 // pred_region
      _
    $region21: #{tpu_custom_call.1} parent=1 // pred_fallthru
      _
    %v21 = vld [vmem:[%s0] sm:$0xf]
    %v22 = vld [vmem:[%s3] sm:$0xff]
    %v23 = vld [vmem:[%s3 + $0x8] sm:$0xff]
    %v24 = vld [vmem:[%s3 + $0x10] sm:$0xff]
    %v25 = vld [vmem:[%s3 + $0x18] sm:$0xff]
    %v26 = vld [vmem:[%s3 + $0x20] sm:$0xff]
    %v27 = vld [vmem:[%s3 + $0x28] sm:$0xff]
    %v28 = vld [vmem:[%s3 + $0x30] sm:$0xff]
    %v29 = vld [vmem:[%s3 + $0x38] sm:$0xff]
    %v30 = vld [vmem:[%s3 + $0x40] sm:$0xff]
    %v31 = vld [vmem:[%s3 + $0x48] sm:$0xff]
    %v32 = vld [vmem:[%s3 + $0x50] sm:$0xff]
    %v33 = vld [vmem:[%s3 + $0x58] sm:$0xff]
    %v34 = vld [vmem:[%s3 + $0x60] sm:$0xff]
    %v35 = vld [vmem:[%s3 + $0x68] sm:$0xff]
    %v36 = vld [vmem:[%s3 + $0x70] sm:$0xff]
    %v37 = vld [vmem:[%s3 + $0x78] sm:$0xff]
    %v38 = vld [vmem:[%s4] sm:$0xf]
    %39 = vmatprep.subr.mxu0 0.0
    %v40 = vand.u32 %v22, 4294901760
    %41 = vmatpush1.msra.mxu0 %v40
    %42 = vmatprep.subr.mxu0 0.0
    %v43 = vand.u32 %v23, 4294901760
    %44 = vmatpush1.msra.mxu0 %v43
    %45 = vmatprep.subr.mxu0 0.0
    %v46 = vand.u32 %v24, 4294901760
    %47 = vmatpush1.msra.mxu0 %v46
    %48 = vmatprep.subr.mxu0 0.0
    %v49 = vand.u32 %v25, 4294901760
    %50 = vmatpush1.msra.mxu0 %v49
    %51 = vmatprep.subr.mxu0 0.0
    %v52 = vand.u32 %v26, 4294901760
    %53 = vmatpush1.msra.mxu0 %v52
    %54 = vmatprep.subr.mxu0 0.0
    %v55 = vand.u32 %v27, 4294901760
    %56 = vmatpush1.msra.mxu0 %v55
    %57 = vmatprep.subr.mxu0 0.0
    %v58 = vand.u32 %v28, 4294901760
    %59 = vmatpush1.msra.mxu0 %v58
    %60 = vmatprep.subr.mxu0 0.0
    %v61 = vand.u32 %v29, 4294901760
    %62 = vmatpush1.msra.mxu0 %v61
    %63 = vmatprep.subr.mxu0 0.0
    %v64 = vand.u32 %v30, 4294901760
    %65 = vmatpush1.msra.mxu0 %v64
    %66 = vmatprep.subr.mxu0 0.0
    %v67 = vand.u32 %v31, 4294901760
    %68 = vmatpush1.msra.mxu0 %v67
    %69 = vmatprep.subr.mxu0 0.0
    %v70 = vand.u32 %v32, 4294901760
    %71 = vmatpush1.msra.mxu0 %v70
    %72 = vmatprep.subr.mxu0 0.0
    %v73 = vand.u32 %v33, 4294901760
    %74 = vmatpush1.msra.mxu0 %v73
    %75 = vmatprep.subr.mxu0 0.0
    %v76 = vand.u32 %v34, 4294901760
    %77 = vmatpush1.msra.mxu0 %v76
    %78 = vmatprep.subr.mxu0 0.0
    %v79 = vand.u32 %v35, 4294901760
    %80 = vmatpush1.msra.mxu0 %v79
    %81 = vmatprep.subr.mxu0 0.0
    %v82 = vand.u32 %v36, 4294901760
    %83 = vmatpush1.msra.mxu0 %v82
    %84 = vmatprep.subr.mxu0 0.0
    %v85 = vand.u32 %v37, 4294901760
    %86 = vmatpush1.msra.mxu0 %v85
    %87 = vmatprep.subr.mxu0 0.0
    %88 = vmatpush1.msra.mxu0 0.0
    %89 = vmatprep.subr.mxu0 0.0
    %90 = vmatpush1.msra.mxu0 0.0
    %91 = vmatprep.subr.mxu0 0.0
    %92 = vmatpush1.msra.mxu0 0.0
    %93 = vmatprep.subr.mxu0 0.0
    %94 = vmatpush1.msra.mxu0 0.0
    %95 = vmatprep.subr.mxu0 0.0
    %96 = vmatpush1.msra.mxu0 0.0
    %97 = vmatprep.subr.mxu0 0.0
    %98 = vmatpush1.msra.mxu0 0.0
    %99 = vmatprep.subr.mxu0 0.0
    %100 = vmatpush1.msra.mxu0 0.0
    %101 = vmatprep.subr.mxu0 0.0
    %102 = vmatpush1.msra.mxu0 0.0
    %103 = vmatprep.subr.mxu0 0.0
    %104 = vmatpush1.msra.mxu0 0.0
    %105 = vmatprep.subr.mxu0 0.0
    %106 = vmatpush1.msra.mxu0 0.0
    %107 = vmatprep.subr.mxu0 0.0
    %108 = vmatpush1.msra.mxu0 0.0
    %109 = vmatprep.subr.mxu0 0.0
    %110 = vmatpush1.msra.mxu0 0.0
    %111 = vmatprep.subr.mxu0 0.0
    %112 = vmatpush1.msra.mxu0 0.0
    %113 = vmatprep.subr.mxu0 0.0
    %114 = vmatpush1.msra.mxu0 0.0
    %115 = vmatprep.subr.mxu0 0.0
    %116 = vmatpush1.msra.mxu0 0.0
    %117 = vmatprep.subr.mxu0 0.0
    %118 = vmatpush1.msra.mxu0 0.0
    %119 = vmatprep.mubr.f32.mxu0 0.0
    %v120 = vand.u32 %v21, 4294901760
    %v121 = vsub.f32 %v21, %v120
    %v122 = vand.u32 %v121, 4294901760
    %v123 = vsub.f32 %v121, %v122
    %v124 = vand.u32 %v123, 4294901760
    %125 = vmatmul.mubr.f32.gmra.mrb[0].mxu0 %v124
    %v126 = vpop.f32.mrb[0].mxu0
    %v127 = vadd.f32 0.0, %v126
    %v128 = vpop.f32.mrb[0].mxu0
    %129 = vdwg.mxu0
    %130 = vmatprep.subr.mxu0 0.0
    %v131 = vand.u32 %v22, 4294901760
    %v132 = vsub.f32 %v22, %v131
    %v133 = vand.u32 %v132, 4294901760
    %v134 = vsub.f32 %v132, %v133
    %v135 = vand.u32 %v134, 4294901760
    %136 = vmatpush1.msra.mxu0 %v135
    %137 = vmatprep.subr.mxu0 0.0
    %v138 = vand.u32 %v23, 4294901760
    %v139 = vsub.f32 %v23, %v138
    %v140 = vand.u32 %v139, 4294901760
    %v141 = vsub.f32 %v139, %v140
    %v142 = vand.u32 %v141, 4294901760
    %143 = vmatpush1.msra.mxu0 %v142
    %144 = vmatprep.subr.mxu0 0.0
    %v145 = vand.u32 %v24, 4294901760
    %v146 = vsub.f32 %v24, %v145
    %v147 = vand.u32 %v146, 4294901760
    %v148 = vsub.f32 %v146, %v147
    %v149 = vand.u32 %v148, 4294901760
    %150 = vmatpush1.msra.mxu0 %v149
    %151 = vmatprep.subr.mxu0 0.0
    %v152 = vand.u32 %v25, 4294901760
    %v153 = vsub.f32 %v25, %v152
    %v154 = vand.u32 %v153, 4294901760
    %v155 = vsub.f32 %v153, %v154
    %v156 = vand.u32 %v155, 4294901760
    %157 = vmatpush1.msra.mxu0 %v156
    %158 = vmatprep.subr.mxu0 0.0
    %v159 = vand.u32 %v26, 4294901760
    %v160 = vsub.f32 %v26, %v159
    %v161 = vand.u32 %v160, 4294901760
    %v162 = vsub.f32 %v160, %v161
    %v163 = vand.u32 %v162, 4294901760
    %164 = vmatpush1.msra.mxu0 %v163
    %165 = vmatprep.subr.mxu0 0.0
    %v166 = vand.u32 %v27, 4294901760
    %v167 = vsub.f32 %v27, %v166
    %v168 = vand.u32 %v167, 4294901760
    %v169 = vsub.f32 %v167, %v168
    %v170 = vand.u32 %v169, 4294901760
    %171 = vmatpush1.msra.mxu0 %v170
    %172 = vmatprep.subr.mxu0 0.0
    %v173 = vand.u32 %v28, 4294901760
    %v174 = vsub.f32 %v28, %v173
    %v175 = vand.u32 %v174, 4294901760
    %v176 = vsub.f32 %v174, %v175
    %v177 = vand.u32 %v176, 4294901760
    %178 = vmatpush1.msra.mxu0 %v177
    %179 = vmatprep.subr.mxu0 0.0
    %v180 = vand.u32 %v29, 4294901760
    %v181 = vsub.f32 %v29, %v180
    %v182 = vand.u32 %v181, 4294901760
    %v183 = vsub.f32 %v181, %v182
    %v184 = vand.u32 %v183, 4294901760
    %185 = vmatpush1.msra.mxu0 %v184
    %186 = vmatprep.subr.mxu0 0.0
    %v187 = vand.u32 %v30, 4294901760
    %v188 = vsub.f32 %v30, %v187
    %v189 = vand.u32 %v188, 4294901760
    %v190 = vsub.f32 %v188, %v189
    %v191 = vand.u32 %v190, 4294901760
    %192 = vmatpush1.msra.mxu0 %v191
    %193 = vmatprep.subr.mxu0 0.0
    %v194 = vand.u32 %v31, 4294901760
    %v195 = vsub.f32 %v31, %v194
    %v196 = vand.u32 %v195, 4294901760
    %v197 = vsub.f32 %v195, %v196
    %v198 = vand.u32 %v197, 4294901760
    %199 = vmatpush1.msra.mxu0 %v198
    %200 = vmatprep.subr.mxu0 0.0
    %v201 = vand.u32 %v32, 4294901760
    %v202 = vsub.f32 %v32, %v201
    %v203 = vand.u32 %v202, 4294901760
    %v204 = vsub.f32 %v202, %v203
    %v205 = vand.u32 %v204, 4294901760
    %206 = vmatpush1.msra.mxu0 %v205
    %207 = vmatprep.subr.mxu0 0.0
    %v208 = vand.u32 %v33, 4294901760
    %v209 = vsub.f32 %v33, %v208
    %v210 = vand.u32 %v209, 4294901760
    %v211 = vsub.f32 %v209, %v210
    %v212 = vand.u32 %v211, 4294901760
    %213 = vmatpush1.msra.mxu0 %v212
    %214 = vmatprep.subr.mxu0 0.0
    %v215 = vand.u32 %v34, 4294901760
    %v216 = vsub.f32 %v34, %v215
    %v217 = vand.u32 %v216, 4294901760
    %v218 = vsub.f32 %v216, %v217
    %v219 = vand.u32 %v218, 4294901760
    %220 = vmatpush1.msra.mxu0 %v219
    %221 = vmatprep.subr.mxu0 0.0
    %v222 = vand.u32 %v35, 4294901760
    %v223 = vsub.f32 %v35, %v222
    %v224 = vand.u32 %v223, 4294901760
    %v225 = vsub.f32 %v223, %v224
    %v226 = vand.u32 %v225, 4294901760
    %227 = vmatpush1.msra.mxu0 %v226
    %228 = vmatprep.subr.mxu0 0.0
    %v229 = vand.u32 %v36, 4294901760
    %v230 = vsub.f32 %v36, %v229
    %v231 = vand.u32 %v230, 4294901760
    %v232 = vsub.f32 %v230, %v231
    %v233 = vand.u32 %v232, 4294901760
    %234 = vmatpush1.msra.mxu0 %v233
    %235 = vmatprep.subr.mxu0 0.0
    %v236 = vand.u32 %v37, 4294901760
    %v237 = vsub.f32 %v37, %v236
    %v238 = vand.u32 %v237, 4294901760
    %v239 = vsub.f32 %v237, %v238
    %v240 = vand.u32 %v239, 4294901760
    %241 = vmatpush1.msra.mxu0 %v240
    %242 = vmatprep.subr.mxu0 0.0
    %243 = vmatpush1.msra.mxu0 0.0
    %244 = vmatprep.subr.mxu0 0.0
    %245 = vmatpush1.msra.mxu0 0.0
    %246 = vmatprep.subr.mxu0 0.0
    %247 = vmatpush1.msra.mxu0 0.0
    %248 = vmatprep.subr.mxu0 0.0
    %249 = vmatpush1.msra.mxu0 0.0
    %250 = vmatprep.subr.mxu0 0.0
    %251 = vmatpush1.msra.mxu0 0.0
    %252 = vmatprep.subr.mxu0 0.0
    %253 = vmatpush1.msra.mxu0 0.0
    %254 = vmatprep.subr.mxu0 0.0
    %255 = vmatpush1.msra.mxu0 0.0
    %256 = vmatprep.subr.mxu0 0.0
    %257 = vmatpush1.msra.mxu0 0.0
    %258 = vmatprep.subr.mxu0 0.0
    %259 = vmatpush1.msra.mxu0 0.0
    %260 = vmatprep.subr.mxu0 0.0
    %261 = vmatpush1.msra.mxu0 0.0
    %262 = vmatprep.subr.mxu0 0.0
    %263 = vmatpush1.msra.mxu0 0.0
    %264 = vmatprep.subr.mxu0 0.0
    %265 = vmatpush1.msra.mxu0 0.0
    %266 = vmatprep.subr.mxu0 0.0
    %267 = vmatpush1.msra.mxu0 0.0
    %268 = vmatprep.subr.mxu0 0.0
    %269 = vmatpush1.msra.mxu0 0.0
    %270 = vmatprep.subr.mxu0 0.0
    %271 = vmatpush1.msra.mxu0 0.0
    %272 = vmatprep.subr.mxu0 0.0
    %273 = vmatpush1.msra.mxu0 0.0
    %274 = vmatprep.mubr.f32.mxu0 0.0
    %v275 = vand.u32 %v21, 4294901760
    %276 = vmatmul.mubr.f32.gmra.mrb[0].mxu0 %v275
    %v277 = vpop.f32.mrb[0].mxu0
    %v278 = vadd.f32 %v127, %v277
    %v279 = vpop.f32.mrb[0].mxu0
    %280 = vdwg.mxu0
    %281 = vmatprep.subr.mxu0 0.0
    %v282 = vand.u32 %v22, 4294901760
    %v283 = vsub.f32 %v22, %v282
    %284 = vmatpush1.msra.mxu0 %v283
    %285 = vmatprep.subr.mxu0 0.0
    %v286 = vand.u32 %v23, 4294901760
    %v287 = vsub.f32 %v23, %v286
    %288 = vmatpush1.msra.mxu0 %v287
    %289 = vmatprep.subr.mxu0 0.0
    %v290 = vand.u32 %v24, 4294901760
    %v291 = vsub.f32 %v24, %v290
    %292 = vmatpush1.msra.mxu0 %v291
    %293 = vmatprep.subr.mxu0 0.0
    %v294 = vand.u32 %v25, 4294901760
    %v295 = vsub.f32 %v25, %v294
    %296 = vmatpush1.msra.mxu0 %v295
    %297 = vmatprep.subr.mxu0 0.0
    %v298 = vand.u32 %v26, 4294901760
    %v299 = vsub.f32 %v26, %v298
    %300 = vmatpush1.msra.mxu0 %v299
    %301 = vmatprep.subr.mxu0 0.0
    %v302 = vand.u32 %v27, 4294901760
    %v303 = vsub.f32 %v27, %v302
    %304 = vmatpush1.msra.mxu0 %v303
    %305 = vmatprep.subr.mxu0 0.0
    %v306 = vand.u32 %v28, 4294901760
    %v307 = vsub.f32 %v28, %v306
    %308 = vmatpush1.msra.mxu0 %v307
    %309 = vmatprep.subr.mxu0 0.0
    %v310 = vand.u32 %v29, 4294901760
    %v311 = vsub.f32 %v29, %v310
    %312 = vmatpush1.msra.mxu0 %v311
    %313 = vmatprep.subr.mxu0 0.0
    %v314 = vand.u32 %v30, 4294901760
    %v315 = vsub.f32 %v30, %v314
    %316 = vmatpush1.msra.mxu0 %v315
    %317 = vmatprep.subr.mxu0 0.0
    %v318 = vand.u32 %v31, 4294901760
    %v319 = vsub.f32 %v31, %v318
    %320 = vmatpush1.msra.mxu0 %v319
    %321 = vmatprep.subr.mxu0 0.0
    %v322 = vand.u32 %v32, 4294901760
    %v323 = vsub.f32 %v32, %v322
    %324 = vmatpush1.msra.mxu0 %v323
    %325 = vmatprep.subr.mxu0 0.0
    %v326 = vand.u32 %v33, 4294901760
    %v327 = vsub.f32 %v33, %v326
    %328 = vmatpush1.msra.mxu0 %v327
    %329 = vmatprep.subr.mxu0 0.0
    %v330 = vand.u32 %v34, 4294901760
    %v331 = vsub.f32 %v34, %v330
    %332 = vmatpush1.msra.mxu0 %v331
    %333 = vmatprep.subr.mxu0 0.0
    %v334 = vand.u32 %v35, 4294901760
    %v335 = vsub.f32 %v35, %v334
    %336 = vmatpush1.msra.mxu0 %v335
    %337 = vmatprep.subr.mxu0 0.0
    %v338 = vand.u32 %v36, 4294901760
    %v339 = vsub.f32 %v36, %v338
    %340 = vmatpush1.msra.mxu0 %v339
    %341 = vmatprep.subr.mxu0 0.0
    %v342 = vand.u32 %v37, 4294901760
    %v343 = vsub.f32 %v37, %v342
    %344 = vmatpush1.msra.mxu0 %v343
    %345 = vmatprep.subr.mxu0 0.0
    %346 = vmatpush1.msra.mxu0 0.0
    %347 = vmatprep.subr.mxu0 0.0
    %348 = vmatpush1.msra.mxu0 0.0
    %349 = vmatprep.subr.mxu0 0.0
    %350 = vmatpush1.msra.mxu0 0.0
    %351 = vmatprep.subr.mxu0 0.0
    %352 = vmatpush1.msra.mxu0 0.0
    %353 = vmatprep.subr.mxu0 0.0
    %354 = vmatpush1.msra.mxu0 0.0
    %355 = vmatprep.subr.mxu0 0.0
    %356 = vmatpush1.msra.mxu0 0.0
    %357 = vmatprep.subr.mxu0 0.0
    %358 = vmatpush1.msra.mxu0 0.0
    %359 = vmatprep.subr.mxu0 0.0
    %360 = vmatpush1.msra.mxu0 0.0
    %361 = vmatprep.subr.mxu0 0.0
    %362 = vmatpush1.msra.mxu0 0.0
    %363 = vmatprep.subr.mxu0 0.0
    %364 = vmatpush1.msra.mxu0 0.0
    %365 = vmatprep.subr.mxu0 0.0
    %366 = vmatpush1.msra.mxu0 0.0
    %367 = vmatprep.subr.mxu0 0.0
    %368 = vmatpush1.msra.mxu0 0.0
    %369 = vmatprep.subr.mxu0 0.0
    %370 = vmatpush1.msra.mxu0 0.0
    %371 = vmatprep.subr.mxu0 0.0
    %372 = vmatpush1.msra.mxu0 0.0
    %373 = vmatprep.subr.mxu0 0.0
    %374 = vmatpush1.msra.mxu0 0.0
    %375 = vmatprep.subr.mxu0 0.0
    %376 = vmatpush1.msra.mxu0 0.0
    %377 = vmatprep.mubr.f32.mxu0 0.0
    %v378 = vand.u32 %v21, 4294901760
    %v379 = vsub.f32 %v21, %v378
    %380 = vmatmul.mubr.f32.gmra.mrb[0].mxu0 %v379
    %v381 = vpop.f32.mrb[0].mxu0
    %v382 = vadd.f32 %v278, %v381
    %v383 = vpop.f32.mrb[0].mxu0
    %384 = vdwg.mxu0
    %385 = vmatprep.subr.mxu0 0.0
    %v386 = vand.u32 %v22, 4294901760
    %387 = vmatpush1.msra.mxu0 %v386
    %388 = vmatprep.subr.mxu0 0.0
    %v389 = vand.u32 %v23, 4294901760
    %390 = vmatpush1.msra.mxu0 %v389
    %391 = vmatprep.subr.mxu0 0.0
    %v392 = vand.u32 %v24, 4294901760
    %393 = vmatpush1.msra.mxu0 %v392
    %394 = vmatprep.subr.mxu0 0.0
    %v395 = vand.u32 %v25, 4294901760
    %396 = vmatpush1.msra.mxu0 %v395
    %397 = vmatprep.subr.mxu0 0.0
    %v398 = vand.u32 %v26, 4294901760
    %399 = vmatpush1.msra.mxu0 %v398
    %400 = vmatprep.subr.mxu0 0.0
    %v401 = vand.u32 %v27, 4294901760
    %402 = vmatpush1.msra.mxu0 %v401
    %403 = vmatprep.subr.mxu0 0.0
    %v404 = vand.u32 %v28, 4294901760
    %405 = vmatpush1.msra.mxu0 %v404
    %406 = vmatprep.subr.mxu0 0.0
    %v407 = vand.u32 %v29, 4294901760
    %408 = vmatpush1.msra.mxu0 %v407
    %409 = vmatprep.subr.mxu0 0.0
    %v410 = vand.u32 %v30, 4294901760
    %411 = vmatpush1.msra.mxu0 %v410
    %412 = vmatprep.subr.mxu0 0.0
    %v413 = vand.u32 %v31, 4294901760
    %414 = vmatpush1.msra.mxu0 %v413
    %415 = vmatprep.subr.mxu0 0.0
    %v416 = vand.u32 %v32, 4294901760
    %417 = vmatpush1.msra.mxu0 %v416
    %418 = vmatprep.subr.mxu0 0.0
    %v419 = vand.u32 %v33, 4294901760
    %420 = vmatpush1.msra.mxu0 %v419
    %421 = vmatprep.subr.mxu0 0.0
    %v422 = vand.u32 %v34, 4294901760
    %423 = vmatpush1.msra.mxu0 %v422
    %424 = vmatprep.subr.mxu0 0.0
    %v425 = vand.u32 %v35, 4294901760
    %426 = vmatpush1.msra.mxu0 %v425
    %427 = vmatprep.subr.mxu0 0.0
    %v428 = vand.u32 %v36, 4294901760
    %429 = vmatpush1.msra.mxu0 %v428
    %430 = vmatprep.subr.mxu0 0.0
    %v431 = vand.u32 %v37, 4294901760
    %432 = vmatpush1.msra.mxu0 %v431
    %433 = vmatprep.subr.mxu0 0.0
    %434 = vmatpush1.msra.mxu0 0.0
    %435 = vmatprep.subr.mxu0 0.0
    %436 = vmatpush1.msra.mxu0 0.0
    %437 = vmatprep.subr.mxu0 0.0
    %438 = vmatpush1.msra.mxu0 0.0
    %439 = vmatprep.subr.mxu0 0.0
    %440 = vmatpush1.msra.mxu0 0.0
    %441 = vmatprep.subr.mxu0 0.0
    %442 = vmatpush1.msra.mxu0 0.0
    %443 = vmatprep.subr.mxu0 0.0
    %444 = vmatpush1.msra.mxu0 0.0
    %445 = vmatprep.subr.mxu0 0.0
    %446 = vmatpush1.msra.mxu0 0.0
    %447 = vmatprep.subr.mxu0 0.0
    %448 = vmatpush1.msra.mxu0 0.0
    %449 = vmatprep.subr.mxu0 0.0
    %450 = vmatpush1.msra.mxu0 0.0
    %451 = vmatprep.subr.mxu0 0.0
    %452 = vmatpush1.msra.mxu0 0.0
    %453 = vmatprep.subr.mxu0 0.0
    %454 = vmatpush1.msra.mxu0 0.0
    %455 = vmatprep.subr.mxu0 0.0
    %456 = vmatpush1.msra.mxu0 0.0
    %457 = vmatprep.subr.mxu0 0.0
    %458 = vmatpush1.msra.mxu0 0.0
    %459 = vmatprep.subr.mxu0 0.0
    %460 = vmatpush1.msra.mxu0 0.0
    %461 = vmatprep.subr.mxu0 0.0
    %462 = vmatpush1.msra.mxu0 0.0
    %463 = vmatprep.subr.mxu0 0.0
    %464 = vmatpush1.msra.mxu0 0.0
    %465 = vmatprep.mubr.f32.mxu0 0.0
    %v466 = vand.u32 %v21, 4294901760
    %v467 = vsub.f32 %v21, %v466
    %v468 = vand.u32 %v467, 4294901760
    %469 = vmatmul.mubr.f32.gmra.mrb[0].mxu0 %v468
    %v470 = vpop.f32.mrb[0].mxu0
    %v471 = vadd.f32 %v382, %v470
    %v472 = vpop.f32.mrb[0].mxu0
    %473 = vdwg.mxu0
    %474 = vmatprep.subr.mxu0 0.0
    %v475 = vand.u32 %v22, 4294901760
    %v476 = vsub.f32 %v22, %v475
    %v477 = vand.u32 %v476, 4294901760
    %478 = vmatpush1.msra.mxu0 %v477
    %479 = vmatprep.subr.mxu0 0.0
    %v480 = vand.u32 %v23, 4294901760
    %v481 = vsub.f32 %v23, %v480
    %v482 = vand.u32 %v481, 4294901760
    %483 = vmatpush1.msra.mxu0 %v482
    %484 = vmatprep.subr.mxu0 0.0
    %v485 = vand.u32 %v24, 4294901760
    %v486 = vsub.f32 %v24, %v485
    %v487 = vand.u32 %v486, 4294901760
    %488 = vmatpush1.msra.mxu0 %v487
    %489 = vmatprep.subr.mxu0 0.0
    %v490 = vand.u32 %v25, 4294901760
    %v491 = vsub.f32 %v25, %v490
    %v492 = vand.u32 %v491, 4294901760
    %493 = vmatpush1.msra.mxu0 %v492
    %494 = vmatprep.subr.mxu0 0.0
    %v495 = vand.u32 %v26, 4294901760
    %v496 = vsub.f32 %v26, %v495
    %v497 = vand.u32 %v496, 4294901760
    %498 = vmatpush1.msra.mxu0 %v497
    %499 = vmatprep.subr.mxu0 0.0
    %v500 = vand.u32 %v27, 4294901760
    %v501 = vsub.f32 %v27, %v500
    %v502 = vand.u32 %v501, 4294901760
    %503 = vmatpush1.msra.mxu0 %v502
    %504 = vmatprep.subr.mxu0 0.0
    %v505 = vand.u32 %v28, 4294901760
    %v506 = vsub.f32 %v28, %v505
    %v507 = vand.u32 %v506, 4294901760
    %508 = vmatpush1.msra.mxu0 %v507
    %509 = vmatprep.subr.mxu0 0.0
    %v510 = vand.u32 %v29, 4294901760
    %v511 = vsub.f32 %v29, %v510
    %v512 = vand.u32 %v511, 4294901760
    %513 = vmatpush1.msra.mxu0 %v512
    %514 = vmatprep.subr.mxu0 0.0
    %v515 = vand.u32 %v30, 4294901760
    %v516 = vsub.f32 %v30, %v515
    %v517 = vand.u32 %v516, 4294901760
    %518 = vmatpush1.msra.mxu0 %v517
    %519 = vmatprep.subr.mxu0 0.0
    %v520 = vand.u32 %v31, 4294901760
    %v521 = vsub.f32 %v31, %v520
    %v522 = vand.u32 %v521, 4294901760
    %523 = vmatpush1.msra.mxu0 %v522
    %524 = vmatprep.subr.mxu0 0.0
    %v525 = vand.u32 %v32, 4294901760
    %v526 = vsub.f32 %v32, %v525
    %v527 = vand.u32 %v526, 4294901760
    %528 = vmatpush1.msra.mxu0 %v527
    %529 = vmatprep.subr.mxu0 0.0
    %v530 = vand.u32 %v33, 4294901760
    %v531 = vsub.f32 %v33, %v530
    %v532 = vand.u32 %v531, 4294901760
    %533 = vmatpush1.msra.mxu0 %v532
    %534 = vmatprep.subr.mxu0 0.0
    %v535 = vand.u32 %v34, 4294901760
    %v536 = vsub.f32 %v34, %v535
    %v537 = vand.u32 %v536, 4294901760
    %538 = vmatpush1.msra.mxu0 %v537
    %539 = vmatprep.subr.mxu0 0.0
    %v540 = vand.u32 %v35, 4294901760
    %v541 = vsub.f32 %v35, %v540
    %v542 = vand.u32 %v541, 4294901760
    %543 = vmatpush1.msra.mxu0 %v542
    %544 = vmatprep.subr.mxu0 0.0
    %v545 = vand.u32 %v36, 4294901760
    %v546 = vsub.f32 %v36, %v545
    %v547 = vand.u32 %v546, 4294901760
    %548 = vmatpush1.msra.mxu0 %v547
    %549 = vmatprep.subr.mxu0 0.0
    %v550 = vand.u32 %v37, 4294901760
    %v551 = vsub.f32 %v37, %v550
    %v552 = vand.u32 %v551, 4294901760
    %553 = vmatpush1.msra.mxu0 %v552
    %554 = vmatprep.subr.mxu0 0.0
    %555 = vmatpush1.msra.mxu0 0.0
    %556 = vmatprep.subr.mxu0 0.0
    %557 = vmatpush1.msra.mxu0 0.0
    %558 = vmatprep.subr.mxu0 0.0
    %559 = vmatpush1.msra.mxu0 0.0
    %560 = vmatprep.subr.mxu0 0.0
    %561 = vmatpush1.msra.mxu0 0.0
    %562 = vmatprep.subr.mxu0 0.0
    %563 = vmatpush1.msra.mxu0 0.0
    %564 = vmatprep.subr.mxu0 0.0
    %565 = vmatpush1.msra.mxu0 0.0
    %566 = vmatprep.subr.mxu0 0.0
    %567 = vmatpush1.msra.mxu0 0.0
    %568 = vmatprep.subr.mxu0 0.0
    %569 = vmatpush1.msra.mxu0 0.0
    %570 = vmatprep.subr.mxu0 0.0
    %571 = vmatpush1.msra.mxu0 0.0
    %572 = vmatprep.subr.mxu0 0.0
    %573 = vmatpush1.msra.mxu0 0.0
    %574 = vmatprep.subr.mxu0 0.0
    %575 = vmatpush1.msra.mxu0 0.0
    %576 = vmatprep.subr.mxu0 0.0
    %577 = vmatpush1.msra.mxu0 0.0
    %578 = vmatprep.subr.mxu0 0.0
    %579 = vmatpush1.msra.mxu0 0.0
    %580 = vmatprep.subr.mxu0 0.0
    %581 = vmatpush1.msra.mxu0 0.0
    %582 = vmatprep.subr.mxu0 0.0
    %583 = vmatpush1.msra.mxu0 0.0
    %584 = vmatprep.subr.mxu0 0.0
    %585 = vmatpush1.msra.mxu0 0.0
    %586 = vmatprep.mubr.f32.mxu0 0.0
    %v587 = vand.u32 %v21, 4294901760
    %588 = vmatmul.mubr.f32.gmra.mrb[0].mxu0 %v587
    %v589 = vpop.f32.mrb[0].mxu0
    %v590 = vadd.f32 %v471, %v589
    %v591 = vpop.f32.mrb[0].mxu0
    %592 = vdwg.mxu0
    %593 = vmatprep.subr.mxu0 0.0
    %v594 = vand.u32 %v22, 4294901760
    %595 = vmatpush1.msra.mxu0 %v594
    %596 = vmatprep.subr.mxu0 0.0
    %v597 = vand.u32 %v23, 4294901760
    %598 = vmatpush1.msra.mxu0 %v597
    %599 = vmatprep.subr.mxu0 0.0
    %v600 = vand.u32 %v24, 4294901760
    %601 = vmatpush1.msra.mxu0 %v600
    %602 = vmatprep.subr.mxu0 0.0
    %v603 = vand.u32 %v25, 4294901760
    %604 = vmatpush1.msra.mxu0 %v603
    %605 = vmatprep.subr.mxu0 0.0
    %v606 = vand.u32 %v26, 4294901760
    %607 = vmatpush1.msra.mxu0 %v606
    %608 = vmatprep.subr.mxu0 0.0
    %v609 = vand.u32 %v27, 4294901760
    %610 = vmatpush1.msra.mxu0 %v609
    %611 = vmatprep.subr.mxu0 0.0
    %v612 = vand.u32 %v28, 4294901760
    %613 = vmatpush1.msra.mxu0 %v612
    %614 = vmatprep.subr.mxu0 0.0
    %v615 = vand.u32 %v29, 4294901760
    %616 = vmatpush1.msra.mxu0 %v615
    %617 = vmatprep.subr.mxu0 0.0
    %v618 = vand.u32 %v30, 4294901760
    %619 = vmatpush1.msra.mxu0 %v618
    %620 = vmatprep.subr.mxu0 0.0
    %v621 = vand.u32 %v31, 4294901760
    %622 = vmatpush1.msra.mxu0 %v621
    %623 = vmatprep.subr.mxu0 0.0
    %v624 = vand.u32 %v32, 4294901760
    %625 = vmatpush1.msra.mxu0 %v624
    %626 = vmatprep.subr.mxu0 0.0
    %v627 = vand.u32 %v33, 4294901760
    %628 = vmatpush1.msra.mxu0 %v627
    %629 = vmatprep.subr.mxu0 0.0
    %v630 = vand.u32 %v34, 4294901760
    %631 = vmatpush1.msra.mxu0 %v630
    %632 = vmatprep.subr.mxu0 0.0
    %v633 = vand.u32 %v35, 4294901760
    %634 = vmatpush1.msra.mxu0 %v633
    %635 = vmatprep.subr.mxu0 0.0
    %v636 = vand.u32 %v36, 4294901760
    %637 = vmatpush1.msra.mxu0 %v636
    %638 = vmatprep.subr.mxu0 0.0
    %v639 = vand.u32 %v37, 4294901760
    %640 = vmatpush1.msra.mxu0 %v639
    %641 = vmatprep.subr.mxu0 0.0
    %642 = vmatpush1.msra.mxu0 0.0
    %643 = vmatprep.subr.mxu0 0.0
    %644 = vmatpush1.msra.mxu0 0.0
    %645 = vmatprep.subr.mxu0 0.0
    %646 = vmatpush1.msra.mxu0 0.0
    %647 = vmatprep.subr.mxu0 0.0
    %648 = vmatpush1.msra.mxu0 0.0
    %649 = vmatprep.subr.mxu0 0.0
    %650 = vmatpush1.msra.mxu0 0.0
    %651 = vmatprep.subr.mxu0 0.0
    %652 = vmatpush1.msra.mxu0 0.0
    %653 = vmatprep.subr.mxu0 0.0
    %654 = vmatpush1.msra.mxu0 0.0
    %655 = vmatprep.subr.mxu0 0.0
    %656 = vmatpush1.msra.mxu0 0.0
    %657 = vmatprep.subr.mxu0 0.0
    %658 = vmatpush1.msra.mxu0 0.0
    %659 = vmatprep.subr.mxu0 0.0
    %660 = vmatpush1.msra.mxu0 0.0
    %661 = vmatprep.subr.mxu0 0.0
    %662 = vmatpush1.msra.mxu0 0.0
    %663 = vmatprep.subr.mxu0 0.0
    %664 = vmatpush1.msra.mxu0 0.0
    %665 = vmatprep.subr.mxu0 0.0
    %666 = vmatpush1.msra.mxu0 0.0
    %667 = vmatprep.subr.mxu0 0.0
    %668 = vmatpush1.msra.mxu0 0.0
    %669 = vmatprep.subr.mxu0 0.0
    %670 = vmatpush1.msra.mxu0 0.0
    %671 = vmatprep.subr.mxu0 0.0
    %672 = vmatpush1.msra.mxu0 0.0
    %673 = vmatprep.mubr.f32.mxu0 0.0
    %v674 = vand.u32 %v21, 4294901760
    %675 = vmatmul.mubr.f32.gmra.mrb[0].mxu0 %v674
    %v676 = vpop.f32.mrb[0].mxu0
    %v677 = vadd.f32 %v590, %v676
    %v678 = vpop.f32.mrb[0].mxu0
    %679 = vdwg.mxu0
    %v680 = vmul.f32 %v21, %v21
    %681 = vmatprep.subr.mxu0 0.0
    %v682 = vand.u32 %v22, 4294901760
    %683 = vmatpush1.msra.mxu0 %v682
    %684 = vmatprep.subr.mxu0 0.0
    %v685 = vand.u32 %v23, 4294901760
    %686 = vmatpush1.msra.mxu0 %v685
    %687 = vmatprep.subr.mxu0 0.0
    %v688 = vand.u32 %v24, 4294901760
    %689 = vmatpush1.msra.mxu0 %v688
    %690 = vmatprep.subr.mxu0 0.0
    %v691 = vand.u32 %v25, 4294901760
    %692 = vmatpush1.msra.mxu0 %v691
    %693 = vmatprep.subr.mxu0 0.0
    %v694 = vand.u32 %v26, 4294901760
    %695 = vmatpush1.msra.mxu0 %v694
    %696 = vmatprep.subr.mxu0 0.0
    %v697 = vand.u32 %v27, 4294901760
    %698 = vmatpush1.msra.mxu0 %v697
    %699 = vmatprep.subr.mxu0 0.0
    %v700 = vand.u32 %v28, 4294901760
    %701 = vmatpush1.msra.mxu0 %v700
    %702 = vmatprep.subr.mxu0 0.0
    %v703 = vand.u32 %v29, 4294901760
    %704 = vmatpush1.msra.mxu0 %v703
    %705 = vmatprep.subr.mxu0 0.0
    %v706 = vand.u32 %v30, 4294901760
    %707 = vmatpush1.msra.mxu0 %v706
    %708 = vmatprep.subr.mxu0 0.0
    %v709 = vand.u32 %v31, 4294901760
    %710 = vmatpush1.msra.mxu0 %v709
    %711 = vmatprep.subr.mxu0 0.0
    %v712 = vand.u32 %v32, 4294901760
    %713 = vmatpush1.msra.mxu0 %v712
    %714 = vmatprep.subr.mxu0 0.0
    %v715 = vand.u32 %v33, 4294901760
    %716 = vmatpush1.msra.mxu0 %v715
    %717 = vmatprep.subr.mxu0 0.0
    %v718 = vand.u32 %v34, 4294901760
    %719 = vmatpush1.msra.mxu0 %v718
    %720 = vmatprep.subr.mxu0 0.0
    %v721 = vand.u32 %v35, 4294901760
    %722 = vmatpush1.msra.mxu0 %v721
    %723 = vmatprep.subr.mxu0 0.0
    %v724 = vand.u32 %v36, 4294901760
    %725 = vmatpush1.msra.mxu0 %v724
    %726 = vmatprep.subr.mxu0 0.0
    %v727 = vand.u32 %v37, 4294901760
    %728 = vmatpush1.msra.mxu0 %v727
    %729 = vmatprep.subr.mxu0 0.0
    %730 = vmatpush1.msra.mxu0 0.0
    %731 = vmatprep.subr.mxu0 0.0
    %732 = vmatpush1.msra.mxu0 0.0
    %733 = vmatprep.subr.mxu0 0.0
    %734 = vmatpush1.msra.mxu0 0.0
    %735 = vmatprep.subr.mxu0 0.0
    %736 = vmatpush1.msra.mxu0 0.0
    %737 = vmatprep.subr.mxu0 0.0
    %738 = vmatpush1.msra.mxu0 0.0
    %739 = vmatprep.subr.mxu0 0.0
    %740 = vmatpush1.msra.mxu0 0.0
    %741 = vmatprep.subr.mxu0 0.0
    %742 = vmatpush1.msra.mxu0 0.0
    %743 = vmatprep.subr.mxu0 0.0
    %744 = vmatpush1.msra.mxu0 0.0
    %745 = vmatprep.subr.mxu0 0.0
    %746 = vmatpush1.msra.mxu0 0.0
    %747 = vmatprep.subr.mxu0 0.0
    %748 = vmatpush1.msra.mxu0 0.0
    %749 = vmatprep.subr.mxu0 0.0
    %750 = vmatpush1.msra.mxu0 0.0
    %751 = vmatprep.subr.mxu0 0.0
    %752 = vmatpush1.msra.mxu0 0.0
    %753 = vmatprep.subr.mxu0 0.0
    %754 = vmatpush1.msra.mxu0 0.0
    %755 = vmatprep.subr.mxu0 0.0
    %756 = vmatpush1.msra.mxu0 0.0
    %757 = vmatprep.subr.mxu0 0.0
    %758 = vmatpush1.msra.mxu0 0.0
    %759 = vmatprep.subr.mxu0 0.0
    %760 = vmatpush1.msra.mxu0 0.0
    %761 = vmatprep.mubr.f32.mxu0 0.0
    %v762 = vand.u32 %v680, 4294901760
    %v763 = vsub.f32 %v680, %v762
    %v764 = vand.u32 %v763, 4294901760
    %v765 = vsub.f32 %v763, %v764
    %v766 = vand.u32 %v765, 4294901760
    %767 = vmatmul.mubr.f32.gmra.mrb[0].mxu0 %v766
    %v768 = vpop.f32.mrb[0].mxu0
    %v769 = vadd.f32 0.0, %v768
    %v770 = vpop.f32.mrb[0].mxu0
    %771 = vdwg.mxu0
    %772 = vmatprep.subr.mxu0 0.0
    %v773 = vand.u32 %v22, 4294901760
    %v774 = vsub.f32 %v22, %v773
    %v775 = vand.u32 %v774, 4294901760
    %v776 = vsub.f32 %v774, %v775
    %v777 = vand.u32 %v776, 4294901760
    %778 = vmatpush1.msra.mxu0 %v777
    %779 = vmatprep.subr.mxu0 0.0
    %v780 = vand.u32 %v23, 4294901760
    %v781 = vsub.f32 %v23, %v780
    %v782 = vand.u32 %v781, 4294901760
    %v783 = vsub.f32 %v781, %v782
    %v784 = vand.u32 %v783, 4294901760
    %785 = vmatpush1.msra.mxu0 %v784
    %786 = vmatprep.subr.mxu0 0.0
    %v787 = vand.u32 %v24, 4294901760
    %v788 = vsub.f32 %v24, %v787
    %v789 = vand.u32 %v788, 4294901760
    %v790 = vsub.f32 %v788, %v789
    %v791 = vand.u32 %v790, 4294901760
    %792 = vmatpush1.msra.mxu0 %v791
    %793 = vmatprep.subr.mxu0 0.0
    %v794 = vand.u32 %v25, 4294901760
    %v795 = vsub.f32 %v25, %v794
    %v796 = vand.u32 %v795, 4294901760
    %v797 = vsub.f32 %v795, %v796
    %v798 = vand.u32 %v797, 4294901760
    %799 = vmatpush1.msra.mxu0 %v798
    %800 = vmatprep.subr.mxu0 0.0
    %v801 = vand.u32 %v26, 4294901760
    %v802 = vsub.f32 %v26, %v801
    %v803 = vand.u32 %v802, 4294901760
    %v804 = vsub.f32 %v802, %v803
    %v805 = vand.u32 %v804, 4294901760
    %806 = vmatpush1.msra.mxu0 %v805
    %807 = vmatprep.subr.mxu0 0.0
    %v808 = vand.u32 %v27, 4294901760
    %v809 = vsub.f32 %v27, %v808
    %v810 = vand.u32 %v809, 4294901760
    %v811 = vsub.f32 %v809, %v810
    %v812 = vand.u32 %v811, 4294901760
    %813 = vmatpush1.msra.mxu0 %v812
    %814 = vmatprep.subr.mxu0 0.0
    %v815 = vand.u32 %v28, 4294901760
    %v816 = vsub.f32 %v28, %v815
    %v817 = vand.u32 %v816, 4294901760
    %v818 = vsub.f32 %v816, %v817
    %v819 = vand.u32 %v818, 4294901760
    %820 = vmatpush1.msra.mxu0 %v819
    %821 = vmatprep.subr.mxu0 0.0
    %v822 = vand.u32 %v29, 4294901760
    %v823 = vsub.f32 %v29, %v822
    %v824 = vand.u32 %v823, 4294901760
    %v825 = vsub.f32 %v823, %v824
    %v826 = vand.u32 %v825, 4294901760
    %827 = vmatpush1.msra.mxu0 %v826
    %828 = vmatprep.subr.mxu0 0.0
    %v829 = vand.u32 %v30, 4294901760
    %v830 = vsub.f32 %v30, %v829
    %v831 = vand.u32 %v830, 4294901760
    %v832 = vsub.f32 %v830, %v831
    %v833 = vand.u32 %v832, 4294901760
    %834 = vmatpush1.msra.mxu0 %v833
    %835 = vmatprep.subr.mxu0 0.0
    %v836 = vand.u32 %v31, 4294901760
    %v837 = vsub.f32 %v31, %v836
    %v838 = vand.u32 %v837, 4294901760
    %v839 = vsub.f32 %v837, %v838
    %v840 = vand.u32 %v839, 4294901760
    %841 = vmatpush1.msra.mxu0 %v840
    %842 = vmatprep.subr.mxu0 0.0
    %v843 = vand.u32 %v32, 4294901760
    %v844 = vsub.f32 %v32, %v843
    %v845 = vand.u32 %v844, 4294901760
    %v846 = vsub.f32 %v844, %v845
    %v847 = vand.u32 %v846, 4294901760
    %848 = vmatpush1.msra.mxu0 %v847
    %849 = vmatprep.subr.mxu0 0.0
    %v850 = vand.u32 %v33, 4294901760
    %v851 = vsub.f32 %v33, %v850
    %v852 = vand.u32 %v851, 4294901760
    %v853 = vsub.f32 %v851, %v852
    %v854 = vand.u32 %v853, 4294901760
    %855 = vmatpush1.msra.mxu0 %v854
    %856 = vmatprep.subr.mxu0 0.0
    %v857 = vand.u32 %v34, 4294901760
    %v858 = vsub.f32 %v34, %v857
    %v859 = vand.u32 %v858, 4294901760
    %v860 = vsub.f32 %v858, %v859
    %v861 = vand.u32 %v860, 4294901760
    %862 = vmatpush1.msra.mxu0 %v861
    %863 = vmatprep.subr.mxu0 0.0
    %v864 = vand.u32 %v35, 4294901760
    %v865 = vsub.f32 %v35, %v864
    %v866 = vand.u32 %v865, 4294901760
    %v867 = vsub.f32 %v865, %v866
    %v868 = vand.u32 %v867, 4294901760
    %869 = vmatpush1.msra.mxu0 %v868
    %870 = vmatprep.subr.mxu0 0.0
    %v871 = vand.u32 %v36, 4294901760
    %v872 = vsub.f32 %v36, %v871
    %v873 = vand.u32 %v872, 4294901760
    %v874 = vsub.f32 %v872, %v873
    %v875 = vand.u32 %v874, 4294901760
    %876 = vmatpush1.msra.mxu0 %v875
    %877 = vmatprep.subr.mxu0 0.0
    %v878 = vand.u32 %v37, 4294901760
    %v879 = vsub.f32 %v37, %v878
    %v880 = vand.u32 %v879, 4294901760
    %v881 = vsub.f32 %v879, %v880
    %v882 = vand.u32 %v881, 4294901760
    %883 = vmatpush1.msra.mxu0 %v882
    %884 = vmatprep.subr.mxu0 0.0
    %885 = vmatpush1.msra.mxu0 0.0
    %886 = vmatprep.subr.mxu0 0.0
    %887 = vmatpush1.msra.mxu0 0.0
    %888 = vmatprep.subr.mxu0 0.0
    %889 = vmatpush1.msra.mxu0 0.0
    %890 = vmatprep.subr.mxu0 0.0
    %891 = vmatpush1.msra.mxu0 0.0
    %892 = vmatprep.subr.mxu0 0.0
    %893 = vmatpush1.msra.mxu0 0.0
    %894 = vmatprep.subr.mxu0 0.0
    %895 = vmatpush1.msra.mxu0 0.0
    %896 = vmatprep.subr.mxu0 0.0
    %897 = vmatpush1.msra.mxu0 0.0
    %898 = vmatprep.subr.mxu0 0.0
    %899 = vmatpush1.msra.mxu0 0.0
    %900 = vmatprep.subr.mxu0 0.0
    %901 = vmatpush1.msra.mxu0 0.0
    %902 = vmatprep.subr.mxu0 0.0
    %903 = vmatpush1.msra.mxu0 0.0
    %904 = vmatprep.subr.mxu0 0.0
    %905 = vmatpush1.msra.mxu0 0.0
    %906 = vmatprep.subr.mxu0 0.0
    %907 = vmatpush1.msra.mxu0 0.0
    %908 = vmatprep.subr.mxu0 0.0
    %909 = vmatpush1.msra.mxu0 0.0
    %910 = vmatprep.subr.mxu0 0.0
    %911 = vmatpush1.msra.mxu0 0.0
    %912 = vmatprep.subr.mxu0 0.0
    %913 = vmatpush1.msra.mxu0 0.0
    %914 = vmatprep.subr.mxu0 0.0
    %915 = vmatpush1.msra.mxu0 0.0
    %916 = vmatprep.mubr.f32.mxu0 0.0
    %v917 = vand.u32 %v680, 4294901760
    %918 = vmatmul.mubr.f32.gmra.mrb[0].mxu0 %v917
    %v919 = vpop.f32.mrb[0].mxu0
    %v920 = vadd.f32 %v769, %v919
    %v921 = vpop.f32.mrb[0].mxu0
    %922 = vdwg.mxu0
    %923 = vmatprep.subr.mxu0 0.0
    %v924 = vand.u32 %v22, 4294901760
    %v925 = vsub.f32 %v22, %v924
    %926 = vmatpush1.msra.mxu0 %v925
    %927 = vmatprep.subr.mxu0 0.0
    %v928 = vand.u32 %v23, 4294901760
    %v929 = vsub.f32 %v23, %v928
    %930 = vmatpush1.msra.mxu0 %v929
    %931 = vmatprep.subr.mxu0 0.0
    %v932 = vand.u32 %v24, 4294901760
    %v933 = vsub.f32 %v24, %v932
    %934 = vmatpush1.msra.mxu0 %v933
    %935 = vmatprep.subr.mxu0 0.0
    %v936 = vand.u32 %v25, 4294901760
    %v937 = vsub.f32 %v25, %v936
    %938 = vmatpush1.msra.mxu0 %v937
    %939 = vmatprep.subr.mxu0 0.0
    %v940 = vand.u32 %v26, 4294901760
    %v941 = vsub.f32 %v26, %v940
    %942 = vmatpush1.msra.mxu0 %v941
    %943 = vmatprep.subr.mxu0 0.0
    %v944 = vand.u32 %v27, 4294901760
    %v945 = vsub.f32 %v27, %v944
    %946 = vmatpush1.msra.mxu0 %v945
    %947 = vmatprep.subr.mxu0 0.0
    %v948 = vand.u32 %v28, 4294901760
    %v949 = vsub.f32 %v28, %v948
    %950 = vmatpush1.msra.mxu0 %v949
    %951 = vmatprep.subr.mxu0 0.0
    %v952 = vand.u32 %v29, 4294901760
    %v953 = vsub.f32 %v29, %v952
    %954 = vmatpush1.msra.mxu0 %v953
    %955 = vmatprep.subr.mxu0 0.0
    %v956 = vand.u32 %v30, 4294901760
    %v957 = vsub.f32 %v30, %v956
    %958 = vmatpush1.msra.mxu0 %v957
    %959 = vmatprep.subr.mxu0 0.0
    %v960 = vand.u32 %v31, 4294901760
    %v961 = vsub.f32 %v31, %v960
    %962 = vmatpush1.msra.mxu0 %v961
    %963 = vmatprep.subr.mxu0 0.0
    %v964 = vand.u32 %v32, 4294901760
    %v965 = vsub.f32 %v32, %v964
    %966 = vmatpush1.msra.mxu0 %v965
    %967 = vmatprep.subr.mxu0 0.0
    %v968 = vand.u32 %v33, 4294901760
    %v969 = vsub.f32 %v33, %v968
    %970 = vmatpush1.msra.mxu0 %v969
    %971 = vmatprep.subr.mxu0 0.0
    %v972 = vand.u32 %v34, 4294901760
    %v973 = vsub.f32 %v34, %v972
    %974 = vmatpush1.msra.mxu0 %v973
    %975 = vmatprep.subr.mxu0 0.0
    %v976 = vand.u32 %v35, 4294901760
    %v977 = vsub.f32 %v35, %v976
    %978 = vmatpush1.msra.mxu0 %v977
    %979 = vmatprep.subr.mxu0 0.0
    %v980 = vand.u32 %v36, 4294901760
    %v981 = vsub.f32 %v36, %v980
    %982 = vmatpush1.msra.mxu0 %v981
    %983 = vmatprep.subr.mxu0 0.0
    %v984 = vand.u32 %v37, 4294901760
    %v985 = vsub.f32 %v37, %v984
    %986 = vmatpush1.msra.mxu0 %v985
    %987 = vmatprep.subr.mxu0 0.0
    %988 = vmatpush1.msra.mxu0 0.0
    %989 = vmatprep.subr.mxu0 0.0
    %990 = vmatpush1.msra.mxu0 0.0
    %991 = vmatprep.subr.mxu0 0.0
    %992 = vmatpush1.msra.mxu0 0.0
    %993 = vmatprep.subr.mxu0 0.0
    %994 = vmatpush1.msra.mxu0 0.0
    %995 = vmatprep.subr.mxu0 0.0
    %996 = vmatpush1.msra.mxu0 0.0
    %997 = vmatprep.subr.mxu0 0.0
    %998 = vmatpush1.msra.mxu0 0.0
    %999 = vmatprep.subr.mxu0 0.0
    %1000 = vmatpush1.msra.mxu0 0.0
    %1001 = vmatprep.subr.mxu0 0.0
    %1002 = vmatpush1.msra.mxu0 0.0
    %1003 = vmatprep.subr.mxu0 0.0
    %1004 = vmatpush1.msra.mxu0 0.0
    %1005 = vmatprep.subr.mxu0 0.0
    %1006 = vmatpush1.msra.mxu0 0.0
    %1007 = vmatprep.subr.mxu0 0.0
    %1008 = vmatpush1.msra.mxu0 0.0
    %1009 = vmatprep.subr.mxu0 0.0
    %1010 = vmatpush1.msra.mxu0 0.0
    %1011 = vmatprep.subr.mxu0 0.0
    %1012 = vmatpush1.msra.mxu0 0.0
    %1013 = vmatprep.subr.mxu0 0.0
    %1014 = vmatpush1.msra.mxu0 0.0
    %1015 = vmatprep.subr.mxu0 0.0
    %1016 = vmatpush1.msra.mxu0 0.0
    %1017 = vmatprep.subr.mxu0 0.0
    %1018 = vmatpush1.msra.mxu0 0.0
    %1019 = vmatprep.mubr.f32.mxu0 0.0
    %v1020 = vand.u32 %v680, 4294901760
    %v1021 = vsub.f32 %v680, %v1020
    %1022 = vmatmul.mubr.f32.gmra.mrb[0].mxu0 %v1021
    %v1023 = vpop.f32.mrb[0].mxu0
    %v1024 = vadd.f32 %v920, %v1023
    %v1025 = vpop.f32.mrb[0].mxu0
    %1026 = vdwg.mxu0
    %1027 = vmatprep.subr.mxu0 0.0
    %v1028 = vand.u32 %v22, 4294901760
    %1029 = vmatpush1.msra.mxu0 %v1028
    %1030 = vmatprep.subr.mxu0 0.0
    %v1031 = vand.u32 %v23, 4294901760
    %1032 = vmatpush1.msra.mxu0 %v1031
    %1033 = vmatprep.subr.mxu0 0.0
    %v1034 = vand.u32 %v24, 4294901760
    %1035 = vmatpush1.msra.mxu0 %v1034
    %1036 = vmatprep.subr.mxu0 0.0
    %v1037 = vand.u32 %v25, 4294901760
    %1038 = vmatpush1.msra.mxu0 %v1037
    %1039 = vmatprep.subr.mxu0 0.0
    %v1040 = vand.u32 %v26, 4294901760
    %1041 = vmatpush1.msra.mxu0 %v1040
    %1042 = vmatprep.subr.mxu0 0.0
    %v1043 = vand.u32 %v27, 4294901760
    %1044 = vmatpush1.msra.mxu0 %v1043
    %1045 = vmatprep.subr.mxu0 0.0
    %v1046 = vand.u32 %v28, 4294901760
    %1047 = vmatpush1.msra.mxu0 %v1046
    %1048 = vmatprep.subr.mxu0 0.0
    %v1049 = vand.u32 %v29, 4294901760
    %1050 = vmatpush1.msra.mxu0 %v1049
    %1051 = vmatprep.subr.mxu0 0.0
    %v1052 = vand.u32 %v30, 4294901760
    %1053 = vmatpush1.msra.mxu0 %v1052
    %1054 = vmatprep.subr.mxu0 0.0
    %v1055 = vand.u32 %v31, 4294901760
    %1056 = vmatpush1.msra.mxu0 %v1055
    %1057 = vmatprep.subr.mxu0 0.0
    %v1058 = vand.u32 %v32, 4294901760
    %1059 = vmatpush1.msra.mxu0 %v1058
    %1060 = vmatprep.subr.mxu0 0.0
    %v1061 = vand.u32 %v33, 4294901760
    %1062 = vmatpush1.msra.mxu0 %v1061
    %1063 = vmatprep.subr.mxu0 0.0
    %v1064 = vand.u32 %v34, 4294901760
    %1065 = vmatpush1.msra.mxu0 %v1064
    %1066 = vmatprep.subr.mxu0 0.0
    %v1067 = vand.u32 %v35, 4294901760
    %1068 = vmatpush1.msra.mxu0 %v1067
    %1069 = vmatprep.subr.mxu0 0.0
    %v1070 = vand.u32 %v36, 4294901760
    %1071 = vmatpush1.msra.mxu0 %v1070
    %1072 = vmatprep.subr.mxu0 0.0
    %v1073 = vand.u32 %v37, 4294901760
    %1074 = vmatpush1.msra.mxu0 %v1073
    %1075 = vmatprep.subr.mxu0 0.0
    %1076 = vmatpush1.msra.mxu0 0.0
    %1077 = vmatprep.subr.mxu0 0.0
    %1078 = vmatpush1.msra.mxu0 0.0
    %1079 = vmatprep.subr.mxu0 0.0
    %1080 = vmatpush1.msra.mxu0 0.0
    %1081 = vmatprep.subr.mxu0 0.0
    %1082 = vmatpush1.msra.mxu0 0.0
    %1083 = vmatprep.subr.mxu0 0.0
    %1084 = vmatpush1.msra.mxu0 0.0
    %1085 = vmatprep.subr.mxu0 0.0
    %1086 = vmatpush1.msra.mxu0 0.0
    %1087 = vmatprep.subr.mxu0 0.0
    %1088 = vmatpush1.msra.mxu0 0.0
    %1089 = vmatprep.subr.mxu0 0.0
    %1090 = vmatpush1.msra.mxu0 0.0
    %1091 = vmatprep.subr.mxu0 0.0
    %1092 = vmatpush1.msra.mxu0 0.0
    %1093 = vmatprep.subr.mxu0 0.0
    %1094 = vmatpush1.msra.mxu0 0.0
    %1095 = vmatprep.subr.mxu0 0.0
    %1096 = vmatpush1.msra.mxu0 0.0
    %1097 = vmatprep.subr.mxu0 0.0
    %1098 = vmatpush1.msra.mxu0 0.0
    %1099 = vmatprep.subr.mxu0 0.0
    %1100 = vmatpush1.msra.mxu0 0.0
    %1101 = vmatprep.subr.mxu0 0.0
    %1102 = vmatpush1.msra.mxu0 0.0
    %1103 = vmatprep.subr.mxu0 0.0
    %1104 = vmatpush1.msra.mxu0 0.0
    %1105 = vmatprep.subr.mxu0 0.0
    %1106 = vmatpush1.msra.mxu0 0.0
    %1107 = vmatprep.mubr.f32.mxu0 0.0
    %v1108 = vand.u32 %v680, 4294901760
    %v1109 = vsub.f32 %v680, %v1108
    %v1110 = vand.u32 %v1109, 4294901760
    %1111 = vmatmul.mubr.f32.gmra.mrb[0].mxu0 %v1110
    %v1112 = vpop.f32.mrb[0].mxu0
    %v1113 = vadd.f32 %v1024, %v1112
    %v1114 = vpop.f32.mrb[0].mxu0
    %1115 = vdwg.mxu0
    %1116 = vmatprep.subr.mxu0 0.0
    %v1117 = vand.u32 %v22, 4294901760
    %v1118 = vsub.f32 %v22, %v1117
    %v1119 = vand.u32 %v1118, 4294901760
    %1120 = vmatpush1.msra.mxu0 %v1119
    %1121 = vmatprep.subr.mxu0 0.0
    %v1122 = vand.u32 %v23, 4294901760
    %v1123 = vsub.f32 %v23, %v1122
    %v1124 = vand.u32 %v1123, 4294901760
    %1125 = vmatpush1.msra.mxu0 %v1124
    %1126 = vmatprep.subr.mxu0 0.0
    %v1127 = vand.u32 %v24, 4294901760
    %v1128 = vsub.f32 %v24, %v1127
    %v1129 = vand.u32 %v1128, 4294901760
    %1130 = vmatpush1.msra.mxu0 %v1129
    %1131 = vmatprep.subr.mxu0 0.0
    %v1132 = vand.u32 %v25, 4294901760
    %v1133 = vsub.f32 %v25, %v1132
    %v1134 = vand.u32 %v1133, 4294901760
    %1135 = vmatpush1.msra.mxu0 %v1134
    %1136 = vmatprep.subr.mxu0 0.0
    %v1137 = vand.u32 %v26, 4294901760
    %v1138 = vsub.f32 %v26, %v1137
    %v1139 = vand.u32 %v1138, 4294901760
    %1140 = vmatpush1.msra.mxu0 %v1139
    %1141 = vmatprep.subr.mxu0 0.0
    %v1142 = vand.u32 %v27, 4294901760
    %v1143 = vsub.f32 %v27, %v1142
    %v1144 = vand.u32 %v1143, 4294901760
    %1145 = vmatpush1.msra.mxu0 %v1144
    %1146 = vmatprep.subr.mxu0 0.0
    %v1147 = vand.u32 %v28, 4294901760
    %v1148 = vsub.f32 %v28, %v1147
    %v1149 = vand.u32 %v1148, 4294901760
    %1150 = vmatpush1.msra.mxu0 %v1149
    %1151 = vmatprep.subr.mxu0 0.0
    %v1152 = vand.u32 %v29, 4294901760
    %v1153 = vsub.f32 %v29, %v1152
    %v1154 = vand.u32 %v1153, 4294901760
    %1155 = vmatpush1.msra.mxu0 %v1154
    %1156 = vmatprep.subr.mxu0 0.0
    %v1157 = vand.u32 %v30, 4294901760
    %v1158 = vsub.f32 %v30, %v1157
    %v1159 = vand.u32 %v1158, 4294901760
    %1160 = vmatpush1.msra.mxu0 %v1159
    %1161 = vmatprep.subr.mxu0 0.0
    %v1162 = vand.u32 %v31, 4294901760
    %v1163 = vsub.f32 %v31, %v1162
    %v1164 = vand.u32 %v1163, 4294901760
    %1165 = vmatpush1.msra.mxu0 %v1164
    %1166 = vmatprep.subr.mxu0 0.0
    %v1167 = vand.u32 %v32, 4294901760
    %v1168 = vsub.f32 %v32, %v1167
    %v1169 = vand.u32 %v1168, 4294901760
    %1170 = vmatpush1.msra.mxu0 %v1169
    %1171 = vmatprep.subr.mxu0 0.0
    %v1172 = vand.u32 %v33, 4294901760
    %v1173 = vsub.f32 %v33, %v1172
    %v1174 = vand.u32 %v1173, 4294901760
    %1175 = vmatpush1.msra.mxu0 %v1174
    %1176 = vmatprep.subr.mxu0 0.0
    %v1177 = vand.u32 %v34, 4294901760
    %v1178 = vsub.f32 %v34, %v1177
    %v1179 = vand.u32 %v1178, 4294901760
    %1180 = vmatpush1.msra.mxu0 %v1179
    %1181 = vmatprep.subr.mxu0 0.0
    %v1182 = vand.u32 %v35, 4294901760
    %v1183 = vsub.f32 %v35, %v1182
    %v1184 = vand.u32 %v1183, 4294901760
    %1185 = vmatpush1.msra.mxu0 %v1184
    %1186 = vmatprep.subr.mxu0 0.0
    %v1187 = vand.u32 %v36, 4294901760
    %v1188 = vsub.f32 %v36, %v1187
    %v1189 = vand.u32 %v1188, 4294901760
    %1190 = vmatpush1.msra.mxu0 %v1189
    %1191 = vmatprep.subr.mxu0 0.0
    %v1192 = vand.u32 %v37, 4294901760
    %v1193 = vsub.f32 %v37, %v1192
    %v1194 = vand.u32 %v1193, 4294901760
    %1195 = vmatpush1.msra.mxu0 %v1194
    %1196 = vmatprep.subr.mxu0 0.0
    %1197 = vmatpush1.msra.mxu0 0.0
    %1198 = vmatprep.subr.mxu0 0.0
    %1199 = vmatpush1.msra.mxu0 0.0
    %1200 = vmatprep.subr.mxu0 0.0
    %1201 = vmatpush1.msra.mxu0 0.0
    %1202 = vmatprep.subr.mxu0 0.0
    %1203 = vmatpush1.msra.mxu0 0.0
    %1204 = vmatprep.subr.mxu0 0.0
    %1205 = vmatpush1.msra.mxu0 0.0
    %1206 = vmatprep.subr.mxu0 0.0
    %1207 = vmatpush1.msra.mxu0 0.0
    %1208 = vmatprep.subr.mxu0 0.0
    %1209 = vmatpush1.msra.mxu0 0.0
    %1210 = vmatprep.subr.mxu0 0.0
    %1211 = vmatpush1.msra.mxu0 0.0
    %1212 = vmatprep.subr.mxu0 0.0
    %1213 = vmatpush1.msra.mxu0 0.0
    %1214 = vmatprep.subr.mxu0 0.0
    %1215 = vmatpush1.msra.mxu0 0.0
    %1216 = vmatprep.subr.mxu0 0.0
    %1217 = vmatpush1.msra.mxu0 0.0
    %1218 = vmatprep.subr.mxu0 0.0
    %1219 = vmatpush1.msra.mxu0 0.0
    %1220 = vmatprep.subr.mxu0 0.0
    %1221 = vmatpush1.msra.mxu0 0.0
    %1222 = vmatprep.subr.mxu0 0.0
    %1223 = vmatpush1.msra.mxu0 0.0
    %1224 = vmatprep.subr.mxu0 0.0
    %1225 = vmatpush1.msra.mxu0 0.0
    %1226 = vmatprep.subr.mxu0 0.0
    %1227 = vmatpush1.msra.mxu0 0.0
    %1228 = vmatprep.mubr.f32.mxu0 0.0
    %v1229 = vand.u32 %v680, 4294901760
    %1230 = vmatmul.mubr.f32.gmra.mrb[0].mxu0 %v1229
    %v1231 = vpop.f32.mrb[0].mxu0
    %v1232 = vadd.f32 %v1113, %v1231
    %v1233 = vpop.f32.mrb[0].mxu0
    %1234 = vdwg.mxu0
    %1235 = vmatprep.subr.mxu0 0.0
    %v1236 = vand.u32 %v22, 4294901760
    %1237 = vmatpush1.msra.mxu0 %v1236
    %1238 = vmatprep.subr.mxu0 0.0
    %v1239 = vand.u32 %v23, 4294901760
    %1240 = vmatpush1.msra.mxu0 %v1239
    %1241 = vmatprep.subr.mxu0 0.0
    %v1242 = vand.u32 %v24, 4294901760
    %1243 = vmatpush1.msra.mxu0 %v1242
    %1244 = vmatprep.subr.mxu0 0.0
    %v1245 = vand.u32 %v25, 4294901760
    %1246 = vmatpush1.msra.mxu0 %v1245
    %1247 = vmatprep.subr.mxu0 0.0
    %v1248 = vand.u32 %v26, 4294901760
    %1249 = vmatpush1.msra.mxu0 %v1248
    %1250 = vmatprep.subr.mxu0 0.0
    %v1251 = vand.u32 %v27, 4294901760
    %1252 = vmatpush1.msra.mxu0 %v1251
    %1253 = vmatprep.subr.mxu0 0.0
    %v1254 = vand.u32 %v28, 4294901760
    %1255 = vmatpush1.msra.mxu0 %v1254
    %1256 = vmatprep.subr.mxu0 0.0
    %v1257 = vand.u32 %v29, 4294901760
    %1258 = vmatpush1.msra.mxu0 %v1257
    %1259 = vmatprep.subr.mxu0 0.0
    %v1260 = vand.u32 %v30, 4294901760
    %1261 = vmatpush1.msra.mxu0 %v1260
    %1262 = vmatprep.subr.mxu0 0.0
    %v1263 = vand.u32 %v31, 4294901760
    %1264 = vmatpush1.msra.mxu0 %v1263
    %1265 = vmatprep.subr.mxu0 0.0
    %v1266 = vand.u32 %v32, 4294901760
    %1267 = vmatpush1.msra.mxu0 %v1266
    %1268 = vmatprep.subr.mxu0 0.0
    %v1269 = vand.u32 %v33, 4294901760
    %1270 = vmatpush1.msra.mxu0 %v1269
    %1271 = vmatprep.subr.mxu0 0.0
    %v1272 = vand.u32 %v34, 4294901760
    %1273 = vmatpush1.msra.mxu0 %v1272
    %1274 = vmatprep.subr.mxu0 0.0
    %v1275 = vand.u32 %v35, 4294901760
    %1276 = vmatpush1.msra.mxu0 %v1275
    %1277 = vmatprep.subr.mxu0 0.0
    %v1278 = vand.u32 %v36, 4294901760
    %1279 = vmatpush1.msra.mxu0 %v1278
    %1280 = vmatprep.subr.mxu0 0.0
    %v1281 = vand.u32 %v37, 4294901760
    %1282 = vmatpush1.msra.mxu0 %v1281
    %1283 = vmatprep.subr.mxu0 0.0
    %1284 = vmatpush1.msra.mxu0 0.0
    %1285 = vmatprep.subr.mxu0 0.0
    %1286 = vmatpush1.msra.mxu0 0.0
    %1287 = vmatprep.subr.mxu0 0.0
    %1288 = vmatpush1.msra.mxu0 0.0
    %1289 = vmatprep.subr.mxu0 0.0
    %1290 = vmatpush1.msra.mxu0 0.0
    %1291 = vmatprep.subr.mxu0 0.0
    %1292 = vmatpush1.msra.mxu0 0.0
    %1293 = vmatprep.subr.mxu0 0.0
    %1294 = vmatpush1.msra.mxu0 0.0
    %1295 = vmatprep.subr.mxu0 0.0
    %1296 = vmatpush1.msra.mxu0 0.0
    %1297 = vmatprep.subr.mxu0 0.0
    %1298 = vmatpush1.msra.mxu0 0.0
    %1299 = vmatprep.subr.mxu0 0.0
    %1300 = vmatpush1.msra.mxu0 0.0
    %1301 = vmatprep.subr.mxu0 0.0
    %1302 = vmatpush1.msra.mxu0 0.0
    %1303 = vmatprep.subr.mxu0 0.0
    %1304 = vmatpush1.msra.mxu0 0.0
    %1305 = vmatprep.subr.mxu0 0.0
    %1306 = vmatpush1.msra.mxu0 0.0
    %1307 = vmatprep.subr.mxu0 0.0
    %1308 = vmatpush1.msra.mxu0 0.0
    %1309 = vmatprep.subr.mxu0 0.0
    %1310 = vmatpush1.msra.mxu0 0.0
    %1311 = vmatprep.subr.mxu0 0.0
    %1312 = vmatpush1.msra.mxu0 0.0
    %1313 = vmatprep.subr.mxu0 0.0
    %1314 = vmatpush1.msra.mxu0 0.0
    %1315 = vmatprep.mubr.f32.mxu0 0.0
    %v1316 = vand.u32 %v680, 4294901760
    %1317 = vmatmul.mubr.f32.gmra.mrb[0].mxu0 %v1316
    %v1318 = vpop.f32.mrb[0].mxu0
    %v1319 = vadd.f32 %v1232, %v1318
    %v1320 = vpop.f32.mrb[0].mxu0
    %1321 = vdwg.mxu0
    %v1322 = vmul.f32 %v677, %v677
    %v1323 = vsub.f32 %v1319, %v1322
    %v1324 = vmax.f32 %v1323, 0.0
    %v1325 = vadd.f32 %v1324, 1e-05
    %v1326 = vrsqrt.pop %v1325
    %vm1327 = vcmask 31744
    %v1329 = vsel %vm1327, %v1326, 0
    %vm1331 = vcmask 1043456
    %v1333 = vsel %vm1331, %v38, 0
    %1335 = vmatprep.subr.mxu0 0.0
    %v1336 = vand.u32 %v1333, 4294901760
    %1337 = vmatpush1.msra.mxu0 %v1336
    %1338 = vmatprep.subr.mxu0 0.0
    %1339 = vmatpush1.msra.mxu0 0.0
    %1340 = vmatprep.subr.mxu0 0.0
    %1341 = vmatpush1.msra.mxu0 0.0
    %1342 = vmatprep.subr.mxu0 0.0
    %1343 = vmatpush1.msra.mxu0 0.0
    %1344 = vmatprep.subr.mxu0 0.0
    %1345 = vmatpush1.msra.mxu0 0.0
    %1346 = vmatprep.subr.mxu0 0.0
    %1347 = vmatpush1.msra.mxu0 0.0
    %1348 = vmatprep.subr.mxu0 0.0
    %1349 = vmatpush1.msra.mxu0 0.0
    %1350 = vmatprep.subr.mxu0 0.0
    %1351 = vmatpush1.msra.mxu0 0.0
    %1352 = vmatprep.subr.mxu0 0.0
    %1353 = vmatpush1.msra.mxu0 0.0
    %1354 = vmatprep.subr.mxu0 0.0
    %1355 = vmatpush1.msra.mxu0 0.0
    %1356 = vmatprep.subr.mxu0 0.0
    %1357 = vmatpush1.msra.mxu0 0.0
    %1358 = vmatprep.subr.mxu0 0.0
    %1359 = vmatpush1.msra.mxu0 0.0
    %1360 = vmatprep.subr.mxu0 0.0
    %1361 = vmatpush1.msra.mxu0 0.0
    %1362 = vmatprep.subr.mxu0 0.0
    %1363 = vmatpush1.msra.mxu0 0.0
    %1364 = vmatprep.subr.mxu0 0.0
    %1365 = vmatpush1.msra.mxu0 0.0
    %1366 = vmatprep.subr.mxu0 0.0
    %1367 = vmatpush1.msra.mxu0 0.0
    %1368 = vmatprep.subr.mxu0 0.0
    %1369 = vmatpush1.msra.mxu0 0.0
    %1370 = vmatprep.subr.mxu0 0.0
    %1371 = vmatpush1.msra.mxu0 0.0
    %1372 = vmatprep.subr.mxu0 0.0
    %1373 = vmatpush1.msra.mxu0 0.0
    %1374 = vmatprep.subr.mxu0 0.0
    %1375 = vmatpush1.msra.mxu0 0.0
    %1376 = vmatprep.subr.mxu0 0.0
    %1377 = vmatpush1.msra.mxu0 0.0
    %1378 = vmatprep.subr.mxu0 0.0
    %1379 = vmatpush1.msra.mxu0 0.0
    %1380 = vmatprep.subr.mxu0 0.0
    %1381 = vmatpush1.msra.mxu0 0.0
    %1382 = vmatprep.subr.mxu0 0.0
    %1383 = vmatpush1.msra.mxu0 0.0
    %1384 = vmatprep.subr.mxu0 0.0
    %1385 = vmatpush1.msra.mxu0 0.0
    %1386 = vmatprep.subr.mxu0 0.0
    %1387 = vmatpush1.msra.mxu0 0.0
    %1388 = vmatprep.subr.mxu0 0.0
    %1389 = vmatpush1.msra.mxu0 0.0
    %1390 = vmatprep.subr.mxu0 0.0
    %1391 = vmatpush1.msra.mxu0 0.0
    %1392 = vmatprep.subr.mxu0 0.0
    %1393 = vmatpush1.msra.mxu0 0.0
    %1394 = vmatprep.subr.mxu0 0.0
    %1395 = vmatpush1.msra.mxu0 0.0
    %1396 = vmatprep.subr.mxu0 0.0
    %1397 = vmatpush1.msra.mxu0 0.0
    %1398 = vmatprep.subr.mxu0 0.0
    %1399 = vmatpush1.msra.mxu0 0.0
    %1400 = vmatprep.mubr.f32.mxu0 0.0
    %v1401 = vand.u32 %v1329, 4294901760
    %v1402 = vsub.f32 %v1329, %v1401
    %v1403 = vand.u32 %v1402, 4294901760
    %v1404 = vsub.f32 %v1402, %v1403
    %v1405 = vand.u32 %v1404, 4294901760
    %1406 = vmatmul.mubr.f32.gmra.mrb[0].mxu0 %v1405
    %v1407 = vpop.f32.mrb[0].mxu0
    %v1408 = vadd.f32 0.0, %v1407
    %v1409 = vpop.f32.mrb[0].mxu0
    %1410 = vdwg.mxu0
    %1411 = vmatprep.subr.mxu0 0.0
    %v1412 = vand.u32 %v1333, 4294901760
    %v1413 = vsub.f32 %v1333, %v1412
    %v1414 = vand.u32 %v1413, 4294901760
    %v1415 = vsub.f32 %v1413, %v1414
    %v1416 = vand.u32 %v1415, 4294901760
    %1417 = vmatpush1.msra.mxu0 %v1416
    %1418 = vmatprep.subr.mxu0 0.0
    %1419 = vmatpush1.msra.mxu0 0.0
    %1420 = vmatprep.subr.mxu0 0.0
    %1421 = vmatpush1.msra.mxu0 0.0
    %1422 = vmatprep.subr.mxu0 0.0
    %1423 = vmatpush1.msra.mxu0 0.0
    %1424 = vmatprep.subr.mxu0 0.0
    %1425 = vmatpush1.msra.mxu0 0.0
    %1426 = vmatprep.subr.mxu0 0.0
    %1427 = vmatpush1.msra.mxu0 0.0
    %1428 = vmatprep.subr.mxu0 0.0
    %1429 = vmatpush1.msra.mxu0 0.0
    %1430 = vmatprep.subr.mxu0 0.0
    %1431 = vmatpush1.msra.mxu0 0.0
    %1432 = vmatprep.subr.mxu0 0.0
    %1433 = vmatpush1.msra.mxu0 0.0
    %1434 = vmatprep.subr.mxu0 0.0
    %1435 = vmatpush1.msra.mxu0 0.0
    %1436 = vmatprep.subr.mxu0 0.0
    %1437 = vmatpush1.msra.mxu0 0.0
    %1438 = vmatprep.subr.mxu0 0.0
    %1439 = vmatpush1.msra.mxu0 0.0
    %1440 = vmatprep.subr.mxu0 0.0
    %1441 = vmatpush1.msra.mxu0 0.0
    %1442 = vmatprep.subr.mxu0 0.0
    %1443 = vmatpush1.msra.mxu0 0.0
    %1444 = vmatprep.subr.mxu0 0.0
    %1445 = vmatpush1.msra.mxu0 0.0
    %1446 = vmatprep.subr.mxu0 0.0
    %1447 = vmatpush1.msra.mxu0 0.0
    %1448 = vmatprep.subr.mxu0 0.0
    %1449 = vmatpush1.msra.mxu0 0.0
    %1450 = vmatprep.subr.mxu0 0.0
    %1451 = vmatpush1.msra.mxu0 0.0
    %1452 = vmatprep.subr.mxu0 0.0
    %1453 = vmatpush1.msra.mxu0 0.0
    %1454 = vmatprep.subr.mxu0 0.0
    %1455 = vmatpush1.msra.mxu0 0.0
    %1456 = vmatprep.subr.mxu0 0.0
    %1457 = vmatpush1.msra.mxu0 0.0
    %1458 = vmatprep.subr.mxu0 0.0
    %1459 = vmatpush1.msra.mxu0 0.0
    %1460 = vmatprep.subr.mxu0 0.0
    %1461 = vmatpush1.msra.mxu0 0.0
    %1462 = vmatprep.subr.mxu0 0.0
    %1463 = vmatpush1.msra.mxu0 0.0
    %1464 = vmatprep.subr.mxu0 0.0
    %1465 = vmatpush1.msra.mxu0 0.0
    %1466 = vmatprep.subr.mxu0 0.0
    %1467 = vmatpush1.msra.mxu0 0.0
    %1468 = vmatprep.subr.mxu0 0.0
    %1469 = vmatpush1.msra.mxu0 0.0
    %1470 = vmatprep.subr.mxu0 0.0
    %1471 = vmatpush1.msra.mxu0 0.0
    %1472 = vmatprep.subr.mxu0 0.0
    %1473 = vmatpush1.msra.mxu0 0.0
    %1474 = vmatprep.subr.mxu0 0.0
    %1475 = vmatpush1.msra.mxu0 0.0
    %1476 = vmatprep.subr.mxu0 0.0
    %1477 = vmatpush1.msra.mxu0 0.0
    %1478 = vmatprep.subr.mxu0 0.0
    %1479 = vmatpush1.msra.mxu0 0.0
    %1480 = vmatprep.mubr.f32.mxu0 0.0
    %v1481 = vand.u32 %v1329, 4294901760
    %1482 = vmatmul.mubr.f32.gmra.mrb[0].mxu0 %v1481
    %v1483 = vpop.f32.mrb[0].mxu0
    %v1484 = vadd.f32 %v1408, %v1483
    %v1485 = vpop.f32.mrb[0].mxu0
    %1486 = vdwg.mxu0
    %1487 = vmatprep.subr.mxu0 0.0
    %v1488 = vand.u32 %v1333, 4294901760
    %v1489 = vsub.f32 %v1333, %v1488
    %1490 = vmatpush1.msra.mxu0 %v1489
    %1491 = vmatprep.subr.mxu0 0.0
    %1492 = vmatpush1.msra.mxu0 0.0
    %1493 = vmatprep.subr.mxu0 0.0
    %1494 = vmatpush1.msra.mxu0 0.0
    %1495 = vmatprep.subr.mxu0 0.0
    %1496 = vmatpush1.msra.mxu0 0.0
    %1497 = vmatprep.subr.mxu0 0.0
    %1498 = vmatpush1.msra.mxu0 0.0
    %1499 = vmatprep.subr.mxu0 0.0
    %1500 = vmatpush1.msra.mxu0 0.0
    %1501 = vmatprep.subr.mxu0 0.0
    %1502 = vmatpush1.msra.mxu0 0.0
    %1503 = vmatprep.subr.mxu0 0.0
    %1504 = vmatpush1.msra.mxu0 0.0
    %1505 = vmatprep.subr.mxu0 0.0
    %1506 = vmatpush1.msra.mxu0 0.0
    %1507 = vmatprep.subr.mxu0 0.0
    %1508 = vmatpush1.msra.mxu0 0.0
    %1509 = vmatprep.subr.mxu0 0.0
    %1510 = vmatpush1.msra.mxu0 0.0
    %1511 = vmatprep.subr.mxu0 0.0
    %1512 = vmatpush1.msra.mxu0 0.0
    %1513 = vmatprep.subr.mxu0 0.0
    %1514 = vmatpush1.msra.mxu0 0.0
    %1515 = vmatprep.subr.mxu0 0.0
    %1516 = vmatpush1.msra.mxu0 0.0
    %1517 = vmatprep.subr.mxu0 0.0
    %1518 = vmatpush1.msra.mxu0 0.0
    %1519 = vmatprep.subr.mxu0 0.0
    %1520 = vmatpush1.msra.mxu0 0.0
    %1521 = vmatprep.subr.mxu0 0.0
    %1522 = vmatpush1.msra.mxu0 0.0
    %1523 = vmatprep.subr.mxu0 0.0
    %1524 = vmatpush1.msra.mxu0 0.0
    %1525 = vmatprep.subr.mxu0 0.0
    %1526 = vmatpush1.msra.mxu0 0.0
    %1527 = vmatprep.subr.mxu0 0.0
    %1528 = vmatpush1.msra.mxu0 0.0
    %1529 = vmatprep.subr.mxu0 0.0
    %1530 = vmatpush1.msra.mxu0 0.0
    %1531 = vmatprep.subr.mxu0 0.0
    %1532 = vmatpush1.msra.mxu0 0.0
    %1533 = vmatprep.subr.mxu0 0.0
    %1534 = vmatpush1.msra.mxu0 0.0
    %1535 = vmatprep.subr.mxu0 0.0
    %1536 = vmatpush1.msra.mxu0 0.0
    %1537 = vmatprep.subr.mxu0 0.0
    %1538 = vmatpush1.msra.mxu0 0.0
    %1539 = vmatprep.subr.mxu0 0.0
    %1540 = vmatpush1.msra.mxu0 0.0
    %1541 = vmatprep.subr.mxu0 0.0
    %1542 = vmatpush1.msra.mxu0 0.0
    %1543 = vmatprep.subr.mxu0 0.0
    %1544 = vmatpush1.msra.mxu0 0.0
    %1545 = vmatprep.subr.mxu0 0.0
    %1546 = vmatpush1.msra.mxu0 0.0
    %1547 = vmatprep.subr.mxu0 0.0
    %1548 = vmatpush1.msra.mxu0 0.0
    %1549 = vmatprep.subr.mxu0 0.0
    %1550 = vmatpush1.msra.mxu0 0.0
    %1551 = vmatprep.subr.mxu0 0.0
    %1552 = vmatpush1.msra.mxu0 0.0
    %1553 = vmatprep.mubr.f32.mxu0 0.0
    %v1554 = vand.u32 %v1329, 4294901760
    %v1555 = vsub.f32 %v1329, %v1554
    %1556 = vmatmul.mubr.f32.gmra.mrb[0].mxu0 %v1555
    %v1557 = vpop.f32.mrb[0].mxu0
    %v1558 = vadd.f32 %v1484, %v1557
    %v1559 = vpop.f32.mrb[0].mxu0
    %1560 = vdwg.mxu0
    %1561 = vmatprep.subr.mxu0 0.0
    %v1562 = vand.u32 %v1333, 4294901760
    %1563 = vmatpush1.msra.mxu0 %v1562
    %1564 = vmatprep.subr.mxu0 0.0
    %1565 = vmatpush1.msra.mxu0 0.0
    %1566 = vmatprep.subr.mxu0 0.0
    %1567 = vmatpush1.msra.mxu0 0.0
    %1568 = vmatprep.subr.mxu0 0.0
    %1569 = vmatpush1.msra.mxu0 0.0
    %1570 = vmatprep.subr.mxu0 0.0
    %1571 = vmatpush1.msra.mxu0 0.0
    %1572 = vmatprep.subr.mxu0 0.0
    %1573 = vmatpush1.msra.mxu0 0.0
    %1574 = vmatprep.subr.mxu0 0.0
    %1575 = vmatpush1.msra.mxu0 0.0
    %1576 = vmatprep.subr.mxu0 0.0
    %1577 = vmatpush1.msra.mxu0 0.0
    %1578 = vmatprep.subr.mxu0 0.0
    %1579 = vmatpush1.msra.mxu0 0.0
    %1580 = vmatprep.subr.mxu0 0.0
    %1581 = vmatpush1.msra.mxu0 0.0
    %1582 = vmatprep.subr.mxu0 0.0
    %1583 = vmatpush1.msra.mxu0 0.0
    %1584 = vmatprep.subr.mxu0 0.0
    %1585 = vmatpush1.msra.mxu0 0.0
    %1586 = vmatprep.subr.mxu0 0.0
    %1587 = vmatpush1.msra.mxu0 0.0
    %1588 = vmatprep.subr.mxu0 0.0
    %1589 = vmatpush1.msra.mxu0 0.0
    %1590 = vmatprep.subr.mxu0 0.0
    %1591 = vmatpush1.msra.mxu0 0.0
    %1592 = vmatprep.subr.mxu0 0.0
    %1593 = vmatpush1.msra.mxu0 0.0
    %1594 = vmatprep.subr.mxu0 0.0
    %1595 = vmatpush1.msra.mxu0 0.0
    %1596 = vmatprep.subr.mxu0 0.0
    %1597 = vmatpush1.msra.mxu0 0.0
    %1598 = vmatprep.subr.mxu0 0.0
    %1599 = vmatpush1.msra.mxu0 0.0
    %1600 = vmatprep.subr.mxu0 0.0
    %1601 = vmatpush1.msra.mxu0 0.0
    %1602 = vmatprep.subr.mxu0 0.0
    %1603 = vmatpush1.msra.mxu0 0.0
    %1604 = vmatprep.subr.mxu0 0.0
    %1605 = vmatpush1.msra.mxu0 0.0
    %1606 = vmatprep.subr.mxu0 0.0
    %1607 = vmatpush1.msra.mxu0 0.0
    %1608 = vmatprep.subr.mxu0 0.0
    %1609 = vmatpush1.msra.mxu0 0.0
    %1610 = vmatprep.subr.mxu0 0.0
    %1611 = vmatpush1.msra.mxu0 0.0
    %1612 = vmatprep.subr.mxu0 0.0
    %1613 = vmatpush1.msra.mxu0 0.0
    %1614 = vmatprep.subr.mxu0 0.0
    %1615 = vmatpush1.msra.mxu0 0.0
    %1616 = vmatprep.subr.mxu0 0.0
    %1617 = vmatpush1.msra.mxu0 0.0
    %1618 = vmatprep.subr.mxu0 0.0
    %1619 = vmatpush1.msra.mxu0 0.0
    %1620 = vmatprep.subr.mxu0 0.0
    %1621 = vmatpush1.msra.mxu0 0.0
    %1622 = vmatprep.subr.mxu0 0.0
    %1623 = vmatpush1.msra.mxu0 0.0
    %1624 = vmatprep.subr.mxu0 0.0
    %1625 = vmatpush1.msra.mxu0 0.0
    %1626 = vmatprep.mubr.f32.mxu0 0.0
    %v1627 = vand.u32 %v1329, 4294901760
    %v1628 = vsub.f32 %v1329, %v1627
    %v1629 = vand.u32 %v1628, 4294901760
    %1630 = vmatmul.mubr.f32.gmra.mrb[0].mxu0 %v1629
    %v1631 = vpop.f32.mrb[0].mxu0
    %v1632 = vadd.f32 %v1558, %v1631
    %v1633 = vpop.f32.mrb[0].mxu0
    %1634 = vdwg.mxu0
    %1635 = vmatprep.subr.mxu0 0.0
    %v1636 = vand.u32 %v1333, 4294901760
    %v1637 = vsub.f32 %v1333, %v1636
    %v1638 = vand.u32 %v1637, 4294901760
    %1639 = vmatpush1.msra.mxu0 %v1638
    %1640 = vmatprep.subr.mxu0 0.0
    %1641 = vmatpush1.msra.mxu0 0.0
    %1642 = vmatprep.subr.mxu0 0.0
    %1643 = vmatpush1.msra.mxu0 0.0
    %1644 = vmatprep.subr.mxu0 0.0
    %1645 = vmatpush1.msra.mxu0 0.0
    %1646 = vmatprep.subr.mxu0 0.0
    %1647 = vmatpush1.msra.mxu0 0.0
    %1648 = vmatprep.subr.mxu0 0.0
    %1649 = vmatpush1.msra.mxu0 0.0
    %1650 = vmatprep.subr.mxu0 0.0
    %1651 = vmatpush1.msra.mxu0 0.0
    %1652 = vmatprep.subr.mxu0 0.0
    %1653 = vmatpush1.msra.mxu0 0.0
    %1654 = vmatprep.subr.mxu0 0.0
    %1655 = vmatpush1.msra.mxu0 0.0
    %1656 = vmatprep.subr.mxu0 0.0
    %1657 = vmatpush1.msra.mxu0 0.0
    %1658 = vmatprep.subr.mxu0 0.0
    %1659 = vmatpush1.msra.mxu0 0.0
    %1660 = vmatprep.subr.mxu0 0.0
    %1661 = vmatpush1.msra.mxu0 0.0
    %1662 = vmatprep.subr.mxu0 0.0
    %1663 = vmatpush1.msra.mxu0 0.0
    %1664 = vmatprep.subr.mxu0 0.0
    %1665 = vmatpush1.msra.mxu0 0.0
    %1666 = vmatprep.subr.mxu0 0.0
    %1667 = vmatpush1.msra.mxu0 0.0
    %1668 = vmatprep.subr.mxu0 0.0
    %1669 = vmatpush1.msra.mxu0 0.0
    %1670 = vmatprep.subr.mxu0 0.0
    %1671 = vmatpush1.msra.mxu0 0.0
    %1672 = vmatprep.subr.mxu0 0.0
    %1673 = vmatpush1.msra.mxu0 0.0
    %1674 = vmatprep.subr.mxu0 0.0
    %1675 = vmatpush1.msra.mxu0 0.0
    %1676 = vmatprep.subr.mxu0 0.0
    %1677 = vmatpush1.msra.mxu0 0.0
    %1678 = vmatprep.subr.mxu0 0.0
    %1679 = vmatpush1.msra.mxu0 0.0
    %1680 = vmatprep.subr.mxu0 0.0
    %1681 = vmatpush1.msra.mxu0 0.0
    %1682 = vmatprep.subr.mxu0 0.0
    %1683 = vmatpush1.msra.mxu0 0.0
    %1684 = vmatprep.subr.mxu0 0.0
    %1685 = vmatpush1.msra.mxu0 0.0
    %1686 = vmatprep.subr.mxu0 0.0
    %1687 = vmatpush1.msra.mxu0 0.0
    %1688 = vmatprep.subr.mxu0 0.0
    %1689 = vmatpush1.msra.mxu0 0.0
    %1690 = vmatprep.subr.mxu0 0.0
    %1691 = vmatpush1.msra.mxu0 0.0
    %1692 = vmatprep.subr.mxu0 0.0
    %1693 = vmatpush1.msra.mxu0 0.0
    %1694 = vmatprep.subr.mxu0 0.0
    %1695 = vmatpush1.msra.mxu0 0.0
    %1696 = vmatprep.subr.mxu0 0.0
    %1697 = vmatpush1.msra.mxu0 0.0
    %1698 = vmatprep.subr.mxu0 0.0
    %1699 = vmatpush1.msra.mxu0 0.0
    %1700 = vmatprep.subr.mxu0 0.0
    %1701 = vmatpush1.msra.mxu0 0.0
    %1702 = vmatprep.mubr.f32.mxu0 0.0
    %v1703 = vand.u32 %v1329, 4294901760
    %1704 = vmatmul.mubr.f32.gmra.mrb[0].mxu0 %v1703
    %v1705 = vpop.f32.mrb[0].mxu0
    %v1706 = vadd.f32 %v1632, %v1705
    %v1707 = vpop.f32.mrb[0].mxu0
    %1708 = vdwg.mxu0
    %1709 = vmatprep.subr.mxu0 0.0
    %v1710 = vand.u32 %v1333, 4294901760
    %1711 = vmatpush1.msra.mxu0 %v1710
    %1712 = vmatprep.subr.mxu0 0.0
    %1713 = vmatpush1.msra.mxu0 0.0
    %1714 = vmatprep.subr.mxu0 0.0
    %1715 = vmatpush1.msra.mxu0 0.0
    %1716 = vmatprep.subr.mxu0 0.0
    %1717 = vmatpush1.msra.mxu0 0.0
    %1718 = vmatprep.subr.mxu0 0.0
    %1719 = vmatpush1.msra.mxu0 0.0
    %1720 = vmatprep.subr.mxu0 0.0
    %1721 = vmatpush1.msra.mxu0 0.0
    %1722 = vmatprep.subr.mxu0 0.0
    %1723 = vmatpush1.msra.mxu0 0.0
    %1724 = vmatprep.subr.mxu0 0.0
    %1725 = vmatpush1.msra.mxu0 0.0
    %1726 = vmatprep.subr.mxu0 0.0
    %1727 = vmatpush1.msra.mxu0 0.0
    %1728 = vmatprep.subr.mxu0 0.0
    %1729 = vmatpush1.msra.mxu0 0.0
    %1730 = vmatprep.subr.mxu0 0.0
    %1731 = vmatpush1.msra.mxu0 0.0
    %1732 = vmatprep.subr.mxu0 0.0
    %1733 = vmatpush1.msra.mxu0 0.0
    %1734 = vmatprep.subr.mxu0 0.0
    %1735 = vmatpush1.msra.mxu0 0.0
    %1736 = vmatprep.subr.mxu0 0.0
    %1737 = vmatpush1.msra.mxu0 0.0
    %1738 = vmatprep.subr.mxu0 0.0
    %1739 = vmatpush1.msra.mxu0 0.0
    %1740 = vmatprep.subr.mxu0 0.0
    %1741 = vmatpush1.msra.mxu0 0.0
    %1742 = vmatprep.subr.mxu0 0.0
    %1743 = vmatpush1.msra.mxu0 0.0
    %1744 = vmatprep.subr.mxu0 0.0
    %1745 = vmatpush1.msra.mxu0 0.0
    %1746 = vmatprep.subr.mxu0 0.0
    %1747 = vmatpush1.msra.mxu0 0.0
    %1748 = vmatprep.subr.mxu0 0.0
    %1749 = vmatpush1.msra.mxu0 0.0
    %1750 = vmatprep.subr.mxu0 0.0
    %1751 = vmatpush1.msra.mxu0 0.0
    %1752 = vmatprep.subr.mxu0 0.0
    %1753 = vmatpush1.msra.mxu0 0.0
    %1754 = vmatprep.subr.mxu0 0.0
    %1755 = vmatpush1.msra.mxu0 0.0
    %1756 = vmatprep.subr.mxu0 0.0
    %1757 = vmatpush1.msra.mxu0 0.0
    %1758 = vmatprep.subr.mxu0 0.0
    %1759 = vmatpush1.msra.mxu0 0.0
    %1760 = vmatprep.subr.mxu0 0.0
    %1761 = vmatpush1.msra.mxu0 0.0
    %1762 = vmatprep.subr.mxu0 0.0
    %1763 = vmatpush1.msra.mxu0 0.0
    %1764 = vmatprep.subr.mxu0 0.0
    %1765 = vmatpush1.msra.mxu0 0.0
    %1766 = vmatprep.subr.mxu0 0.0
    %1767 = vmatpush1.msra.mxu0 0.0
    %1768 = vmatprep.subr.mxu0 0.0
    %1769 = vmatpush1.msra.mxu0 0.0
    %1770 = vmatprep.subr.mxu0 0.0
    %1771 = vmatpush1.msra.mxu0 0.0
    %1772 = vmatprep.subr.mxu0 0.0
    %1773 = vmatpush1.msra.mxu0 0.0
    %1774 = vmatprep.mubr.f32.mxu0 0.0
    %v1775 = vand.u32 %v1329, 4294901760
    %1776 = vmatmul.mubr.f32.gmra.mrb[0].mxu0 %v1775
    %v1777 = vpop.f32.mrb[0].mxu0
    %v1778 = vadd.f32 %v1706, %v1777
    %v1779 = vpop.f32.mrb[0].mxu0
    %1780 = vdwg.mxu0
    %v1781 = vmul.f32 %v677, %v1326
    %v1783 = vsel %vm1327, %v1781, 0
    %1785 = vmatprep.subr.mxu0 0.0
    %v1786 = vand.u32 %v1333, 4294901760
    %1787 = vmatpush1.msra.mxu0 %v1786
    %1788 = vmatprep.subr.mxu0 0.0
    %1789 = vmatpush1.msra.mxu0 0.0
    %1790 = vmatprep.subr.mxu0 0.0
    %1791 = vmatpush1.msra.mxu0 0.0
    %1792 = vmatprep.subr.mxu0 0.0
    %1793 = vmatpush1.msra.mxu0 0.0
    %1794 = vmatprep.subr.mxu0 0.0
    %1795 = vmatpush1.msra.mxu0 0.0
    %1796 = vmatprep.subr.mxu0 0.0
    %1797 = vmatpush1.msra.mxu0 0.0
    %1798 = vmatprep.subr.mxu0 0.0
    %1799 = vmatpush1.msra.mxu0 0.0
    %1800 = vmatprep.subr.mxu0 0.0
    %1801 = vmatpush1.msra.mxu0 0.0
    %1802 = vmatprep.subr.mxu0 0.0
    %1803 = vmatpush1.msra.mxu0 0.0
    %1804 = vmatprep.subr.mxu0 0.0
    %1805 = vmatpush1.msra.mxu0 0.0
    %1806 = vmatprep.subr.mxu0 0.0
    %1807 = vmatpush1.msra.mxu0 0.0
    %1808 = vmatprep.subr.mxu0 0.0
    %1809 = vmatpush1.msra.mxu0 0.0
    %1810 = vmatprep.subr.mxu0 0.0
    %1811 = vmatpush1.msra.mxu0 0.0
    %1812 = vmatprep.subr.mxu0 0.0
    %1813 = vmatpush1.msra.mxu0 0.0
    %1814 = vmatprep.subr.mxu0 0.0
    %1815 = vmatpush1.msra.mxu0 0.0
    %1816 = vmatprep.subr.mxu0 0.0
    %1817 = vmatpush1.msra.mxu0 0.0
    %1818 = vmatprep.subr.mxu0 0.0
    %1819 = vmatpush1.msra.mxu0 0.0
    %1820 = vmatprep.subr.mxu0 0.0
    %1821 = vmatpush1.msra.mxu0 0.0
    %1822 = vmatprep.subr.mxu0 0.0
    %1823 = vmatpush1.msra.mxu0 0.0
    %1824 = vmatprep.subr.mxu0 0.0
    %1825 = vmatpush1.msra.mxu0 0.0
    %1826 = vmatprep.subr.mxu0 0.0
    %1827 = vmatpush1.msra.mxu0 0.0
    %1828 = vmatprep.subr.mxu0 0.0
    %1829 = vmatpush1.msra.mxu0 0.0
    %1830 = vmatprep.subr.mxu0 0.0
    %1831 = vmatpush1.msra.mxu0 0.0
    %1832 = vmatprep.subr.mxu0 0.0
    %1833 = vmatpush1.msra.mxu0 0.0
    %1834 = vmatprep.subr.mxu0 0.0
    %1835 = vmatpush1.msra.mxu0 0.0
    %1836 = vmatprep.subr.mxu0 0.0
    %1837 = vmatpush1.msra.mxu0 0.0
    %1838 = vmatprep.subr.mxu0 0.0
    %1839 = vmatpush1.msra.mxu0 0.0
    %1840 = vmatprep.subr.mxu0 0.0
    %1841 = vmatpush1.msra.mxu0 0.0
    %1842 = vmatprep.subr.mxu0 0.0
    %1843 = vmatpush1.msra.mxu0 0.0
    %1844 = vmatprep.subr.mxu0 0.0
    %1845 = vmatpush1.msra.mxu0 0.0
    %1846 = vmatprep.subr.mxu0 0.0
    %1847 = vmatpush1.msra.mxu0 0.0
    %1848 = vmatprep.subr.mxu0 0.0
    %1849 = vmatpush1.msra.mxu0 0.0
    %1850 = vmatprep.mubr.f32.mxu0 0.0
    %v1851 = vand.u32 %v1783, 4294901760
    %v1852 = vsub.f32 %v1783, %v1851
    %v1853 = vand.u32 %v1852, 4294901760
    %v1854 = vsub.f32 %v1852, %v1853
    %v1855 = vand.u32 %v1854, 4294901760
    %1856 = vmatmul.mubr.f32.gmra.mrb[0].mxu0 %v1855
    %v1857 = vpop.f32.mrb[0].mxu0
    %v1858 = vadd.f32 0.0, %v1857
    %v1859 = vpop.f32.mrb[0].mxu0
    %1860 = vdwg.mxu0
    %1861 = vmatprep.subr.mxu0 0.0
    %v1862 = vand.u32 %v1333, 4294901760
    %v1863 = vsub.f32 %v1333, %v1862
    %v1864 = vand.u32 %v1863, 4294901760
    %v1865 = vsub.f32 %v1863, %v1864
    %v1866 = vand.u32 %v1865, 4294901760
    %1867 = vmatpush1.msra.mxu0 %v1866
    %1868 = vmatprep.subr.mxu0 0.0
    %1869 = vmatpush1.msra.mxu0 0.0
    %1870 = vmatprep.subr.mxu0 0.0
    %1871 = vmatpush1.msra.mxu0 0.0
    %1872 = vmatprep.subr.mxu0 0.0
    %1873 = vmatpush1.msra.mxu0 0.0
    %1874 = vmatprep.subr.mxu0 0.0
    %1875 = vmatpush1.msra.mxu0 0.0
    %1876 = vmatprep.subr.mxu0 0.0
    %1877 = vmatpush1.msra.mxu0 0.0
    %1878 = vmatprep.subr.mxu0 0.0
    %1879 = vmatpush1.msra.mxu0 0.0
    %1880 = vmatprep.subr.mxu0 0.0
    %1881 = vmatpush1.msra.mxu0 0.0
    %1882 = vmatprep.subr.mxu0 0.0
    %1883 = vmatpush1.msra.mxu0 0.0
    %1884 = vmatprep.subr.mxu0 0.0
    %1885 = vmatpush1.msra.mxu0 0.0
    %1886 = vmatprep.subr.mxu0 0.0
    %1887 = vmatpush1.msra.mxu0 0.0
    %1888 = vmatprep.subr.mxu0 0.0
    %1889 = vmatpush1.msra.mxu0 0.0
    %1890 = vmatprep.subr.mxu0 0.0
    %1891 = vmatpush1.msra.mxu0 0.0
    %1892 = vmatprep.subr.mxu0 0.0
    %1893 = vmatpush1.msra.mxu0 0.0
    %1894 = vmatprep.subr.mxu0 0.0
    %1895 = vmatpush1.msra.mxu0 0.0
    %1896 = vmatprep.subr.mxu0 0.0
    %1897 = vmatpush1.msra.mxu0 0.0
    %1898 = vmatprep.subr.mxu0 0.0
    %1899 = vmatpush1.msra.mxu0 0.0
    %1900 = vmatprep.subr.mxu0 0.0
    %1901 = vmatpush1.msra.mxu0 0.0
    %1902 = vmatprep.subr.mxu0 0.0
    %1903 = vmatpush1.msra.mxu0 0.0
    %1904 = vmatprep.subr.mxu0 0.0
    %1905 = vmatpush1.msra.mxu0 0.0
    %1906 = vmatprep.subr.mxu0 0.0
    %1907 = vmatpush1.msra.mxu0 0.0
    %1908 = vmatprep.subr.mxu0 0.0
    %1909 = vmatpush1.msra.mxu0 0.0
    %1910 = vmatprep.subr.mxu0 0.0
    %1911 = vmatpush1.msra.mxu0 0.0
    %1912 = vmatprep.subr.mxu0 0.0
    %1913 = vmatpush1.msra.mxu0 0.0
    %1914 = vmatprep.subr.mxu0 0.0
    %1915 = vmatpush1.msra.mxu0 0.0
    %1916 = vmatprep.subr.mxu0 0.0
    %1917 = vmatpush1.msra.mxu0 0.0
    %1918 = vmatprep.subr.mxu0 0.0
    %1919 = vmatpush1.msra.mxu0 0.0
    %1920 = vmatprep.subr.mxu0 0.0
    %1921 = vmatpush1.msra.mxu0 0.0
    %1922 = vmatprep.subr.mxu0 0.0
    %1923 = vmatpush1.msra.mxu0 0.0
    %1924 = vmatprep.subr.mxu0 0.0
    %1925 = vmatpush1.msra.mxu0 0.0
    %1926 = vmatprep.subr.mxu0 0.0
    %1927 = vmatpush1.msra.mxu0 0.0
    %1928 = vmatprep.subr.mxu0 0.0
    %1929 = vmatpush1.msra.mxu0 0.0
    %1930 = vmatprep.mubr.f32.mxu0 0.0
    %v1931 = vand.u32 %v1783, 4294901760
    %1932 = vmatmul.mubr.f32.gmra.mrb[0].mxu0 %v1931
    %v1933 = vpop.f32.mrb[0].mxu0
    %v1934 = vadd.f32 %v1858, %v1933
    %v1935 = vpop.f32.mrb[0].mxu0
    %1936 = vdwg.mxu0
    %1937 = vmatprep.subr.mxu0 0.0
    %v1938 = vand.u32 %v1333, 4294901760
    %v1939 = vsub.f32 %v1333, %v1938
    %1940 = vmatpush1.msra.mxu0 %v1939
    %1941 = vmatprep.subr.mxu0 0.0
    %1942 = vmatpush1.msra.mxu0 0.0
    %1943 = vmatprep.subr.mxu0 0.0
    %1944 = vmatpush1.msra.mxu0 0.0
    %1945 = vmatprep.subr.mxu0 0.0
    %1946 = vmatpush1.msra.mxu0 0.0
    %1947 = vmatprep.subr.mxu0 0.0
    %1948 = vmatpush1.msra.mxu0 0.0
    %1949 = vmatprep.subr.mxu0 0.0
    %1950 = vmatpush1.msra.mxu0 0.0
    %1951 = vmatprep.subr.mxu0 0.0
    %1952 = vmatpush1.msra.mxu0 0.0
    %1953 = vmatprep.subr.mxu0 0.0
    %1954 = vmatpush1.msra.mxu0 0.0
    %1955 = vmatprep.subr.mxu0 0.0
    %1956 = vmatpush1.msra.mxu0 0.0
    %1957 = vmatprep.subr.mxu0 0.0
    %1958 = vmatpush1.msra.mxu0 0.0
    %1959 = vmatprep.subr.mxu0 0.0
    %1960 = vmatpush1.msra.mxu0 0.0
    %1961 = vmatprep.subr.mxu0 0.0
    %1962 = vmatpush1.msra.mxu0 0.0
    %1963 = vmatprep.subr.mxu0 0.0
    %1964 = vmatpush1.msra.mxu0 0.0
    %1965 = vmatprep.subr.mxu0 0.0
    %1966 = vmatpush1.msra.mxu0 0.0
    %1967 = vmatprep.subr.mxu0 0.0
    %1968 = vmatpush1.msra.mxu0 0.0
    %1969 = vmatprep.subr.mxu0 0.0
    %1970 = vmatpush1.msra.mxu0 0.0
    %1971 = vmatprep.subr.mxu0 0.0
    %1972 = vmatpush1.msra.mxu0 0.0
    %1973 = vmatprep.subr.mxu0 0.0
    %1974 = vmatpush1.msra.mxu0 0.0
    %1975 = vmatprep.subr.mxu0 0.0
    %1976 = vmatpush1.msra.mxu0 0.0
    %1977 = vmatprep.subr.mxu0 0.0
    %1978 = vmatpush1.msra.mxu0 0.0
    %1979 = vmatprep.subr.mxu0 0.0
    %1980 = vmatpush1.msra.mxu0 0.0
    %1981 = vmatprep.subr.mxu0 0.0
    %1982 = vmatpush1.msra.mxu0 0.0
    %1983 = vmatprep.subr.mxu0 0.0
    %1984 = vmatpush1.msra.mxu0 0.0
    %1985 = vmatprep.subr.mxu0 0.0
    %1986 = vmatpush1.msra.mxu0 0.0
    %1987 = vmatprep.subr.mxu0 0.0
    %1988 = vmatpush1.msra.mxu0 0.0
    %1989 = vmatprep.subr.mxu0 0.0
    %1990 = vmatpush1.msra.mxu0 0.0
    %1991 = vmatprep.subr.mxu0 0.0
    %1992 = vmatpush1.msra.mxu0 0.0
    %1993 = vmatprep.subr.mxu0 0.0
    %1994 = vmatpush1.msra.mxu0 0.0
    %1995 = vmatprep.subr.mxu0 0.0
    %1996 = vmatpush1.msra.mxu0 0.0
    %1997 = vmatprep.subr.mxu0 0.0
    %1998 = vmatpush1.msra.mxu0 0.0
    %1999 = vmatprep.subr.mxu0 0.0
    %2000 = vmatpush1.msra.mxu0 0.0
    %2001 = vmatprep.subr.mxu0 0.0
    %2002 = vmatpush1.msra.mxu0 0.0
    %2003 = vmatprep.mubr.f32.mxu0 0.0
    %v2004 = vand.u32 %v1783, 4294901760
    %v2005 = vsub.f32 %v1783, %v2004
    %2006 = vmatmul.mubr.f32.gmra.mrb[0].mxu0 %v2005
    %v2007 = vpop.f32.mrb[0].mxu0
    %v2008 = vadd.f32 %v1934, %v2007
    %v2009 = vpop.f32.mrb[0].mxu0
    %2010 = vdwg.mxu0
    %2011 = vmatprep.subr.mxu0 0.0
    %v2012 = vand.u32 %v1333, 4294901760
    %2013 = vmatpush1.msra.mxu0 %v2012
    %2014 = vmatprep.subr.mxu0 0.0
    %2015 = vmatpush1.msra.mxu0 0.0
    %2016 = vmatprep.subr.mxu0 0.0
    %2017 = vmatpush1.msra.mxu0 0.0
    %2018 = vmatprep.subr.mxu0 0.0
    %2019 = vmatpush1.msra.mxu0 0.0
    %2020 = vmatprep.subr.mxu0 0.0
    %2021 = vmatpush1.msra.mxu0 0.0
    %2022 = vmatprep.subr.mxu0 0.0
    %2023 = vmatpush1.msra.mxu0 0.0
    %2024 = vmatprep.subr.mxu0 0.0
    %2025 = vmatpush1.msra.mxu0 0.0
    %2026 = vmatprep.subr.mxu0 0.0
    %2027 = vmatpush1.msra.mxu0 0.0
    %2028 = vmatprep.subr.mxu0 0.0
    %2029 = vmatpush1.msra.mxu0 0.0
    %2030 = vmatprep.subr.mxu0 0.0
    %2031 = vmatpush1.msra.mxu0 0.0
    %2032 = vmatprep.subr.mxu0 0.0
    %2033 = vmatpush1.msra.mxu0 0.0
    %2034 = vmatprep.subr.mxu0 0.0
    %2035 = vmatpush1.msra.mxu0 0.0
    %2036 = vmatprep.subr.mxu0 0.0
    %2037 = vmatpush1.msra.mxu0 0.0
    %2038 = vmatprep.subr.mxu0 0.0
    %2039 = vmatpush1.msra.mxu0 0.0
    %2040 = vmatprep.subr.mxu0 0.0
    %2041 = vmatpush1.msra.mxu0 0.0
    %2042 = vmatprep.subr.mxu0 0.0
    %2043 = vmatpush1.msra.mxu0 0.0
    %2044 = vmatprep.subr.mxu0 0.0
    %2045 = vmatpush1.msra.mxu0 0.0
    %2046 = vmatprep.subr.mxu0 0.0
    %2047 = vmatpush1.msra.mxu0 0.0
    %2048 = vmatprep.subr.mxu0 0.0
    %2049 = vmatpush1.msra.mxu0 0.0
    %2050 = vmatprep.subr.mxu0 0.0
    %2051 = vmatpush1.msra.mxu0 0.0
    %2052 = vmatprep.subr.mxu0 0.0
    %2053 = vmatpush1.msra.mxu0 0.0
    %2054 = vmatprep.subr.mxu0 0.0
    %2055 = vmatpush1.msra.mxu0 0.0
    %2056 = vmatprep.subr.mxu0 0.0
    %2057 = vmatpush1.msra.mxu0 0.0
    %2058 = vmatprep.subr.mxu0 0.0
    %2059 = vmatpush1.msra.mxu0 0.0
    %2060 = vmatprep.subr.mxu0 0.0
    %2061 = vmatpush1.msra.mxu0 0.0
    %2062 = vmatprep.subr.mxu0 0.0
    %2063 = vmatpush1.msra.mxu0 0.0
    %2064 = vmatprep.subr.mxu0 0.0
    %2065 = vmatpush1.msra.mxu0 0.0
    %2066 = vmatprep.subr.mxu0 0.0
    %2067 = vmatpush1.msra.mxu0 0.0
    %2068 = vmatprep.subr.mxu0 0.0
    %2069 = vmatpush1.msra.mxu0 0.0
    %2070 = vmatprep.subr.mxu0 0.0
    %2071 = vmatpush1.msra.mxu0 0.0
    %2072 = vmatprep.subr.mxu0 0.0
    %2073 = vmatpush1.msra.mxu0 0.0
    %2074 = vmatprep.subr.mxu0 0.0
    %2075 = vmatpush1.msra.mxu0 0.0
    %2076 = vmatprep.mubr.f32.mxu0 0.0
    %v2077 = vand.u32 %v1783, 4294901760
    %v2078 = vsub.f32 %v1783, %v2077
    %v2079 = vand.u32 %v2078, 4294901760
    %2080 = vmatmul.mubr.f32.gmra.mrb[0].mxu0 %v2079
    %v2081 = vpop.f32.mrb[0].mxu0
    %v2082 = vadd.f32 %v2008, %v2081
    %v2083 = vpop.f32.mrb[0].mxu0
    %2084 = vdwg.mxu0
    %2085 = vmatprep.subr.mxu0 0.0
    %v2086 = vand.u32 %v1333, 4294901760
    %v2087 = vsub.f32 %v1333, %v2086
    %v2088 = vand.u32 %v2087, 4294901760
    %2089 = vmatpush1.msra.mxu0 %v2088
    %2090 = vmatprep.subr.mxu0 0.0
    %2091 = vmatpush1.msra.mxu0 0.0
    %2092 = vmatprep.subr.mxu0 0.0
    %2093 = vmatpush1.msra.mxu0 0.0
    %2094 = vmatprep.subr.mxu0 0.0
    %2095 = vmatpush1.msra.mxu0 0.0
    %2096 = vmatprep.subr.mxu0 0.0
    %2097 = vmatpush1.msra.mxu0 0.0
    %2098 = vmatprep.subr.mxu0 0.0
    %2099 = vmatpush1.msra.mxu0 0.0
    %2100 = vmatprep.subr.mxu0 0.0
    %2101 = vmatpush1.msra.mxu0 0.0
    %2102 = vmatprep.subr.mxu0 0.0
    %2103 = vmatpush1.msra.mxu0 0.0
    %2104 = vmatprep.subr.mxu0 0.0
    %2105 = vmatpush1.msra.mxu0 0.0
    %2106 = vmatprep.subr.mxu0 0.0
    %2107 = vmatpush1.msra.mxu0 0.0
    %2108 = vmatprep.subr.mxu0 0.0
    %2109 = vmatpush1.msra.mxu0 0.0
    %2110 = vmatprep.subr.mxu0 0.0
    %2111 = vmatpush1.msra.mxu0 0.0
    %2112 = vmatprep.subr.mxu0 0.0
    %2113 = vmatpush1.msra.mxu0 0.0
    %2114 = vmatprep.subr.mxu0 0.0
    %2115 = vmatpush1.msra.mxu0 0.0
    %2116 = vmatprep.subr.mxu0 0.0
    %2117 = vmatpush1.msra.mxu0 0.0
    %2118 = vmatprep.subr.mxu0 0.0
    %2119 = vmatpush1.msra.mxu0 0.0
    %2120 = vmatprep.subr.mxu0 0.0
    %2121 = vmatpush1.msra.mxu0 0.0
    %2122 = vmatprep.subr.mxu0 0.0
    %2123 = vmatpush1.msra.mxu0 0.0
    %2124 = vmatprep.subr.mxu0 0.0
    %2125 = vmatpush1.msra.mxu0 0.0
    %2126 = vmatprep.subr.mxu0 0.0
    %2127 = vmatpush1.msra.mxu0 0.0
    %2128 = vmatprep.subr.mxu0 0.0
    %2129 = vmatpush1.msra.mxu0 0.0
    %2130 = vmatprep.subr.mxu0 0.0
    %2131 = vmatpush1.msra.mxu0 0.0
    %2132 = vmatprep.subr.mxu0 0.0
    %2133 = vmatpush1.msra.mxu0 0.0
    %2134 = vmatprep.subr.mxu0 0.0
    %2135 = vmatpush1.msra.mxu0 0.0
    %2136 = vmatprep.subr.mxu0 0.0
    %2137 = vmatpush1.msra.mxu0 0.0
    %2138 = vmatprep.subr.mxu0 0.0
    %2139 = vmatpush1.msra.mxu0 0.0
    %2140 = vmatprep.subr.mxu0 0.0
    %2141 = vmatpush1.msra.mxu0 0.0
    %2142 = vmatprep.subr.mxu0 0.0
    %2143 = vmatpush1.msra.mxu0 0.0
    %2144 = vmatprep.subr.mxu0 0.0
    %2145 = vmatpush1.msra.mxu0 0.0
    %2146 = vmatprep.subr.mxu0 0.0
    %2147 = vmatpush1.msra.mxu0 0.0
    %2148 = vmatprep.subr.mxu0 0.0
    %2149 = vmatpush1.msra.mxu0 0.0
    %2150 = vmatprep.subr.mxu0 0.0
    %2151 = vmatpush1.msra.mxu0 0.0
    %2152 = vmatprep.mubr.f32.mxu0 0.0
    %v2153 = vand.u32 %v1783, 4294901760
    %2154 = vmatmul.mubr.f32.gmra.mrb[0].mxu0 %v2153
    %v2155 = vpop.f32.mrb[0].mxu0
    %v2156 = vadd.f32 %v2082, %v2155
    %v2157 = vpop.f32.mrb[0].mxu0
    %2158 = vdwg.mxu0
    %2159 = vmatprep.subr.mxu0 0.0
    %v2160 = vand.u32 %v1333, 4294901760
    %2161 = vmatpush1.msra.mxu0 %v2160
    %2162 = vmatprep.subr.mxu0 0.0
    %2163 = vmatpush1.msra.mxu0 0.0
    %2164 = vmatprep.subr.mxu0 0.0
    %2165 = vmatpush1.msra.mxu0 0.0
    %2166 = vmatprep.subr.mxu0 0.0
    %2167 = vmatpush1.msra.mxu0 0.0
    %2168 = vmatprep.subr.mxu0 0.0
    %2169 = vmatpush1.msra.mxu0 0.0
    %2170 = vmatprep.subr.mxu0 0.0
    %2171 = vmatpush1.msra.mxu0 0.0
    %2172 = vmatprep.subr.mxu0 0.0
    %2173 = vmatpush1.msra.mxu0 0.0
    %2174 = vmatprep.subr.mxu0 0.0
    %2175 = vmatpush1.msra.mxu0 0.0
    %2176 = vmatprep.subr.mxu0 0.0
    %2177 = vmatpush1.msra.mxu0 0.0
    %2178 = vmatprep.subr.mxu0 0.0
    %2179 = vmatpush1.msra.mxu0 0.0
    %2180 = vmatprep.subr.mxu0 0.0
    %2181 = vmatpush1.msra.mxu0 0.0
    %2182 = vmatprep.subr.mxu0 0.0
    %2183 = vmatpush1.msra.mxu0 0.0
    %2184 = vmatprep.subr.mxu0 0.0
    %2185 = vmatpush1.msra.mxu0 0.0
    %2186 = vmatprep.subr.mxu0 0.0
    %2187 = vmatpush1.msra.mxu0 0.0
    %2188 = vmatprep.subr.mxu0 0.0
    %2189 = vmatpush1.msra.mxu0 0.0
    %2190 = vmatprep.subr.mxu0 0.0
    %2191 = vmatpush1.msra.mxu0 0.0
    %2192 = vmatprep.subr.mxu0 0.0
    %2193 = vmatpush1.msra.mxu0 0.0
    %2194 = vmatprep.subr.mxu0 0.0
    %2195 = vmatpush1.msra.mxu0 0.0
    %2196 = vmatprep.subr.mxu0 0.0
    %2197 = vmatpush1.msra.mxu0 0.0
    %2198 = vmatprep.subr.mxu0 0.0
    %2199 = vmatpush1.msra.mxu0 0.0
    %2200 = vmatprep.subr.mxu0 0.0
    %2201 = vmatpush1.msra.mxu0 0.0
    %2202 = vmatprep.subr.mxu0 0.0
    %2203 = vmatpush1.msra.mxu0 0.0
    %2204 = vmatprep.subr.mxu0 0.0
    %2205 = vmatpush1.msra.mxu0 0.0
    %2206 = vmatprep.subr.mxu0 0.0
    %2207 = vmatpush1.msra.mxu0 0.0
    %2208 = vmatprep.subr.mxu0 0.0
    %2209 = vmatpush1.msra.mxu0 0.0
    %2210 = vmatprep.subr.mxu0 0.0
    %2211 = vmatpush1.msra.mxu0 0.0
    %2212 = vmatprep.subr.mxu0 0.0
    %2213 = vmatpush1.msra.mxu0 0.0
    %2214 = vmatprep.subr.mxu0 0.0
    %2215 = vmatpush1.msra.mxu0 0.0
    %2216 = vmatprep.subr.mxu0 0.0
    %2217 = vmatpush1.msra.mxu0 0.0
    %2218 = vmatprep.subr.mxu0 0.0
    %2219 = vmatpush1.msra.mxu0 0.0
    %2220 = vmatprep.subr.mxu0 0.0
    %2221 = vmatpush1.msra.mxu0 0.0
    %2222 = vmatprep.subr.mxu0 0.0
    %2223 = vmatpush1.msra.mxu0 0.0
    %2224 = vmatprep.mubr.f32.mxu0 0.0
    %v2225 = vand.u32 %v1783, 4294901760
    %2226 = vmatmul.mubr.f32.gmra.mrb[0].mxu0 %v2225
    %v2227 = vpop.f32.mrb[0].mxu0
    %v2228 = vadd.f32 %v2156, %v2227
    %v2229 = vpop.f32.mrb[0].mxu0
    %2230 = vdwg.mxu0
    %v2231 = vmul.f32 %v21, %v1778
    %v2232 = vsub.f32 %v2231, %v2228
    %v2233 = vld [vmem:[%s1] sm:$0x1]
    %v2235 = vlaneseq
    %v2236 = vshrl.u32 %v2235, 7
    %v2237 = vsub.s32 0, %v2236
    %v2238 = vrot.slane %v2233, %v2237
    %v2240 = vmul.f32 %v2232, %v2238
    %v2241 = vld [vmem:[%s2] sm:$0x1]
    %v2243 = vlaneseq
    %v2244 = vshrl.u32 %v2243, 7
    %v2245 = vsub.s32 0, %v2244
    %v2246 = vrot.slane %v2241, %v2245
    %v2248 = vadd.f32 %v2240, %v2246
    %2249 = vst [vmem:[#allocation2] sm:$0xf] %v2248
    // Predicated region
    $region22: #{tpu_custom_call.1} parent=1 // pred_check
      _
    $region23: #{tpu_custom_call.1} parent=1 // pred_check_branch
      %2251 = sbr.rel (0) target = $region25
    $region24: #{tpu_custom_call.1} parent=1 // pred_region
      %s2253 = ssub.s32 64, 64
      %2254 = vsyncadd [#allocation3], %s2253
      %s2256 = sshll.u32 [#allocation2], 4
      %s2257 = int_to_ptr.vmem [resolvable:$true] %s2256
      %2259 = dma.vmem_to_hbm [thread:$0]  %s2257, 64, %s5, [#allocation3]
    $region25: #{tpu_custom_call.1} parent=1 // pred_fallthru
      _
    // Predicated region
    $region26: #{tpu_custom_call.1} parent=1 // pred_check
      _
    $region27: #{tpu_custom_call.1} parent=1 // pred_check_branch
      %2261 = sbr.rel (0) target = $region29
    $region28: #{tpu_custom_call.1} parent=1 // pred_region
      %2262 = dma.done [#allocation3], 64
    $region29: #{tpu_custom_call.1} parent=1 // pred_fallthru
      _
    %2263 = vsyncpa [#allocation3], 1

</llo_original>
